<compile_context>
chip_gen: v7x
topology: tpu7x:2x2x1
jax: 0.10.0
libtpu: 0.0.40
codegen_flags: <defaults>
</compile_context>

<pallas_src>
import functools

import jax
import jax.numpy as jnp
from jax import lax
from jax.experimental import pallas as pl
from jax.experimental.pallas import tpu as pltpu

KSIZE = 7
PAD = 3
LANE = 128


def _cbam_kernel(x_ref, w1_ref, b1_ref, w2_ref, b2_ref, rowm_ref, colm_ref,
                 wconv_ref, cb_ref, o_ref, *, width, hw, hwp, bt, padded):
    # x_ref / o_ref : [bt, C, HWp]   (bt batch elements per grid step, NCHW flat)
    # w1_ref: [Ch, C], b1_ref: [Ch, 1], w2_ref: [C, Ch], b2_ref: [C, 1]
    # rowm_ref / colm_ref: [7, HWp] f32 validity masks of the "same" 7x7 conv
    # wconv_ref: [7, 16]  (col = 2*dh + branch, branch 0 = max, 1 = avg)
    # cb_ref   : SMEM (1,) conv bias
    C = x_ref.shape[1]

    if padded:
        lane = lax.broadcasted_iota(jnp.int32, (1, hwp), 1)
        lane_valid = lane < hw                                    # [1, HWp]

    # ---------- channel attention: fused MLP over [C, 2*bt] pooled stats ------
    avg_cols, max_cols = [], []
    for b in range(bt):
        xb = x_ref[b].astype(jnp.float32)                         # [C, HWp]
        avg_cols.append(jnp.sum(xb, axis=1, keepdims=True) * (1.0 / hw))
        xm = jnp.where(lane_valid, xb, -jnp.inf) if padded else xb
        max_cols.append(jnp.max(xm, axis=1, keepdims=True))
    stats = jnp.concatenate(avg_cols + max_cols, axis=1)          # [C, 2*bt]
    h = jnp.dot(w1_ref[...], stats,
                preferred_element_type=jnp.float32) + b1_ref[...]
    h = jnp.maximum(h, 0.0)                                       # [Ch, 2*bt]
    o = jnp.dot(w2_ref[...], h,
                preferred_element_type=jnp.float32) + b2_ref[...] # [C, 2*bt]
    cam = jax.nn.sigmoid(o[:, :bt] + o[:, bt:])                   # [C, bt]

    # ---------- spatial attention + apply, per batch element ------------------
    wconv = wconv_ref[...]                                        # [7, 16]
    rowm = rowm_ref[...]                                          # [7, HWp]
    colm = colm_ref[...]                                          # [7, HWp]
    bias = cb_ref[0]
    zeros2 = jnp.zeros((2, hwp), jnp.float32)

    for b in range(bt):
        f1 = x_ref[b].astype(jnp.float32) * cam[:, b:b + 1]       # [C, HWp]
        mxc = jnp.max(f1, axis=0, keepdims=True)                  # [1, HWp]
        avc = jnp.sum(f1, axis=0, keepdims=True) * (1.0 / C)      # [1, HWp]
        planes = jnp.concatenate([mxc, avc], axis=0)              # [2, HWp]

        # Row taps: 6 XLU rolls + row-validity masks (dh == PAD needs neither),
        # stacked into a [16, HWp] tile (rows ordered (dh, {max, avg}), padded
        # with two zero rows) for one MXU contraction with wconv [7, 16].
        pieces = []
        for dh in range(KSIZE):
            if dh == PAD:
                pieces.append(planes)
            else:
                shift = (-(dh - PAD) * width) % hwp
                rp = pltpu.roll(planes, shift=shift, axis=1)
                pieces.append(rp * rowm[dh:dh + 1, :])
        pieces.append(zeros2)
        taps = jnp.concatenate(pieces, axis=0)                    # [16, HWp]
        s = jnp.dot(wconv, taps,
                    preferred_element_type=jnp.float32)           # [7, HWp]

        # Column taps: 6 XLU rolls + column-validity masks (dw == PAD is free).
        acc = s[PAD:PAD + 1, :]
        for dw in range(KSIZE):
            if dw == PAD:
                continue
            shift = (-(dw - PAD)) % hwp
            acc = acc + (pltpu.roll(s[dw:dw + 1, :], shift=shift, axis=1)
                         * colm[dw:dw + 1, :])

        sam = jax.nn.sigmoid(acc + bias)                          # [1, HWp]
        o_ref[b] = (f1 * sam).astype(o_ref.dtype)                 # lane-dense store


def _vmem_capacity_bytes():
    try:
        cap = getattr(pltpu.get_tpu_info(), "vmem_capacity_bytes", None)
        if cap:
            return int(cap)
    except Exception:
        pass
    return 64 * 1024 * 1024        # conservative default (v7x per-core VMEM)


def _pick_block_batch(B, C, hwp, itemsize, vmem_cap):
    """Largest batch-block that divides B, keeps the double-buffered in+out
    feature block well inside VMEM, and leaves >= 2 grid steps (so both v7x
    TensorCores get work) whenever B >= 2."""
    per_step = 2 * 2 * C * hwp * itemsize      # in + out, double-buffered
    budget = max(vmem_cap // 4, 4 << 20)
    for cand in range(B, 0, -1):
        if B % cand:
            continue
        if cand * per_step > budget:
            continue
        if B >= 2 and B // cand < 2:
            continue
        return cand
    return 1


def cbam_forward(x_nchw, params):
    """CBAM forward. x_nchw: [B, C, H, W]. Returns same shape / dtype."""
    w1, b1, w2, b2, conv_w, conv_b = params
    B, C, H, W = x_nchw.shape
    HW = H * W
    HWp = ((HW + LANE - 1) // LANE) * LANE
    Ch = w1.shape[1]
    dtype = x_nchw.dtype

    # NCHW-native: flatten spatial dims (free reshape); pad the lane axis to a
    # multiple of 128 so all stores are unmasked, full-vreg.
    x_flat = x_nchw.reshape(B, C, HW)
    if HWp != HW:
        x_flat = jnp.pad(x_flat, ((0, 0), (0, 0), (0, HWp - HW)))

    # CAM MLP weights in column orientation so the kernel works on [C, 2*bt].
    w1t = jnp.transpose(w1).astype(jnp.float32)                 # [Ch, C]
    w2t = jnp.transpose(w2).astype(jnp.float32)                 # [C, Ch]
    b1c = b1.reshape(Ch, 1).astype(jnp.float32)
    b2c = b2.reshape(C, 1).astype(jnp.float32)

    # 7x7 conv weights packed for the MXU: wconv[dw, 2*dh + branch],
    # branch 0 = max plane, 1 = avg plane; padded 14 -> 16 columns.
    w_stack = jnp.stack([conv_w[0], conv_w[1]], axis=-1)        # [dh, dw, 2]
    wconv = jnp.transpose(w_stack, (1, 0, 2)).reshape(KSIZE, 2 * KSIZE)
    wconv = jnp.pad(wconv, ((0, 0), (0, 2))).astype(jnp.float32)  # [7, 16]
    cb = conv_b.reshape(1).astype(jnp.float32)

    # Row / column validity masks of the flattened "same" 7x7 convolution.
    pos = jnp.arange(HWp, dtype=jnp.int32)
    hh = pos // W
    ww = pos % W
    row_mask = jnp.stack(
        [((hh + (dh - PAD) >= 0) & (hh + (dh - PAD) < H)) for dh in range(KSIZE)],
        axis=0).astype(jnp.float32)                             # [7, HWp]
    col_mask = jnp.stack(
        [((ww + (dw - PAD) >= 0) & (ww + (dw - PAD) < W)) for dw in range(KSIZE)],
        axis=0).astype(jnp.float32)                             # [7, HWp]

    itemsize = jnp.dtype(dtype).itemsize
    vmem_cap = _vmem_capacity_bytes()
    bt = _pick_block_batch(B, C, HWp, itemsize, vmem_cap)
    num_steps = B // bt

    # Generation-aware VMEM budget derived from actual need.
    feat_bytes = 2 * 2 * bt * C * HWp * itemsize
    const_bytes = 2 * 4 * (2 * KSIZE * HWp + Ch * C + Ch + C * Ch + C + KSIZE * 16)
    need = feat_bytes + const_bytes + (2 << 20)
    vmem_limit = int(min(0.8 * vmem_cap, max(2 * need, 16 << 20)))

    kernel = functools.partial(_cbam_kernel, width=W, hw=HW, hwp=HWp, bt=bt,
                               padded=(HWp != HW))

    out_flat = pl.pallas_call(
        kernel,
        out_shape=jax.ShapeDtypeStruct((B, C, HWp), dtype),
        grid=(num_steps,),
        in_specs=[
            pl.BlockSpec((bt, C, HWp), lambda i: (i, 0, 0)),
            pl.BlockSpec((Ch, C), lambda i: (0, 0)),
            pl.BlockSpec((Ch, 1), lambda i: (0, 0)),
            pl.BlockSpec((C, Ch), lambda i: (0, 0)),
            pl.BlockSpec((C, 1), lambda i: (0, 0)),
            pl.BlockSpec((KSIZE, HWp), lambda i: (0, 0)),
            pl.BlockSpec((KSIZE, HWp), lambda i: (0, 0)),
            pl.BlockSpec((KSIZE, 16), lambda i: (0, 0)),
            pl.BlockSpec(memory_space=pltpu.MemorySpace.SMEM),   # conv bias
        ],
        out_specs=pl.BlockSpec((bt, C, HWp), lambda i: (i, 0, 0)),
        compiler_params=pltpu.CompilerParams(
            dimension_semantics=("parallel",),
            vmem_limit_bytes=vmem_limit),
    )(x_flat, w1t, b1c, w2t, b2c, row_mask, col_mask, wconv, cb)

    # TODO(synk): for very large C*HWp blocks (v7x 64 MiB VMEM) switch to a
    # two-pass H-tiled variant (stats pass + apply/SAM pass with a 3-row halo).
    if HWp != HW:
        out_flat = out_flat[:, :, :HW]
    return out_flat.reshape(B, C, H, W)


def cbam_reference(x, params):
    """Pure-JAX reference (NCHW), mirrors the PyTorch module semantics."""
    w1, b1, w2, b2, conv_w, conv_b = params

    def mlp(v):  # v: [B, C]
        return jnp.maximum(v @ w1 + b1, 0.0) @ w2 + b2

    avg = jnp.mean(x, axis=(2, 3))
    mxv = jnp.max(x, axis=(2, 3))
    cam = jax.nn.sigmoid(mlp(avg) + mlp(mxv))[:, :, None, None]
    f1 = x * cam

    mxc = jnp.max(f1, axis=1, keepdims=True)
    avc = jnp.mean(f1, axis=1, keepdims=True)
    s = jnp.concatenate([mxc, avc], axis=1)                      # [B, 2, H, W]
    conv = lax.conv_general_dilated(
        s, conv_w[None], window_strides=(1, 1),
        padding=[(PAD, PAD), (PAD, PAD)],
        dimension_numbers=("NCHW", "OIHW", "NCHW"))
    sam = jax.nn.sigmoid(conv + conv_b[0])                       # [B, 1, H, W]
    return f1 * sam


if __name__ == "__main__":
    jax.config.update("jax_default_matmul_precision", "highest")

    def make_case(key, B, C, H, W, radio):
        Ch = max(C // radio, 1)
        ks = jax.random.split(key, 7)
        x = jax.random.normal(ks[0], (B, C, H, W), jnp.float32)
        w1 = 0.2 * jax.random.normal(ks[1], (C, Ch), jnp.float32)
        b1 = 0.1 * jax.random.normal(ks[2], (Ch,), jnp.float32)
        w2 = 0.2 * jax.random.normal(ks[3], (Ch, C), jnp.float32)
        b2 = 0.1 * jax.random.normal(ks[4], (C,), jnp.float32)
        conv_w = 0.1 * jax.random.normal(ks[5], (2, KSIZE, KSIZE), jnp.float32)
        conv_b = 0.1 * jax.random.normal(ks[6], (1,), jnp.float32)
        return x, (w1, b1, w2, b2, conv_w, conv_b)

    k1, k2, k3 = jax.random.split(jax.random.PRNGKey(0), 3)
    cases = [
        make_case(k1, 2, 8, 16, 16, 2),   # 128-aligned HW, one batch / step
        make_case(k2, 1, 4, 16, 16, 2),   # B = 1, small C
        make_case(k3, 4, 8, 12, 12, 2),   # HW = 144 -> padded to 256; bt = 2
    ]
    for x, params in cases:
        out = jax.block_until_ready(cbam_forward(x, params))
        ref = cbam_reference(x, params)
        assert out.shape == x.shape and out.dtype == x.dtype
        err = float(jnp.max(jnp.abs(out - ref)))
        if not jnp.allclose(out, ref, atol=5e-5, rtol=5e-5):
            raise AssertionError(f"mismatch: max abs err = {err}")
    print("KERNEL_OK")
</pallas_src>

<mosaic_0001>
module attributes {stable_mosaic.version = 11 : i64} {
  func.func @_cbam_kernel(%arg0: i32, %arg1: memref<1x8x256xf32, #tpu.memory_space<vmem>>, %arg2: memref<4x8xf32, #tpu.memory_space<vmem>>, %arg3: memref<4x1xf32, #tpu.memory_space<vmem>>, %arg4: memref<8x4xf32, #tpu.memory_space<vmem>>, %arg5: memref<8x1xf32, #tpu.memory_space<vmem>>, %arg6: memref<7x256xf32, #tpu.memory_space<vmem>>, %arg7: memref<7x256xf32, #tpu.memory_space<vmem>>, %arg8: memref<7x16xf32, #tpu.memory_space<vmem>>, %arg9: memref<1xf32, #tpu.memory_space<smem>>, %arg10: memref<1x8x256xf32, #tpu.memory_space<vmem>>) attributes {dimension_semantics = [#tpu.dimension_semantics<parallel>], iteration_bounds = array<i64: 2>, scalar_prefetch = 0 : i64, scratch_operands = 0 : i64, tpu.core_type = #tpu.core_type<tc>, window_params = [{transform_indices = @transform_0, window_bounds = array<i64: 1, 8, 256>}, {pipeline_mode = #tpu.pipeline_mode<synchronous>, transform_indices = @transform_1, window_bounds = array<i64: 4, 8>}, {pipeline_mode = #tpu.pipeline_mode<synchronous>, transform_indices = @transform_2, window_bounds = array<i64: 4, 1>}, {pipeline_mode = #tpu.pipeline_mode<synchronous>, transform_indices = @transform_3, window_bounds = array<i64: 8, 4>}, {pipeline_mode = #tpu.pipeline_mode<synchronous>, transform_indices = @transform_4, window_bounds = array<i64: 8, 1>}, {pipeline_mode = #tpu.pipeline_mode<synchronous>, transform_indices = @transform_5, window_bounds = array<i64: 7, 256>}, {pipeline_mode = #tpu.pipeline_mode<synchronous>, transform_indices = @transform_6, window_bounds = array<i64: 7, 256>}, {pipeline_mode = #tpu.pipeline_mode<synchronous>, transform_indices = @transform_7, window_bounds = array<i64: 7, 16>}, {transform_indices = @transform_8, window_bounds = array<i64: 1>}, {transform_indices = @transform_9, window_bounds = array<i64: 1, 8, 256>}]} {
    %c0 = arith.constant 0 : index
    %c0_0 = arith.constant 0 : index
    %c0_1 = arith.constant 0 : index
    %0 = vector.load %arg1[%c0, %c0_0, %c0_1] : memref<1x8x256xf32, #tpu.memory_space<vmem>>, vector<1x8x256xf32>
    %1 = vector.shape_cast %0 : vector<1x8x256xf32> to vector<8x256xf32>
    %cst = arith.constant dense<0.000000e+00> : vector<8xf32>
    %2 = vector.multi_reduction <add>, %1, %cst [1] : vector<8x256xf32> to vector<8xf32>
    %3 = vector.shape_cast %2 : vector<8xf32> to vector<8x1xf32>
    %cst_2 = arith.constant 3.906250e-03 : f32
    %4 = vector.broadcast %cst_2 : f32 to vector<8x1xf32>
    %5 = arith.mulf %3, %4 : vector<8x1xf32>
    %cst_3 = arith.constant dense<0xFF800000> : vector<8xf32>
    %6 = vector.multi_reduction <maximumf>, %1, %cst_3 [1] : vector<8x256xf32> to vector<8xf32>
    %7 = vector.shape_cast %6 : vector<8xf32> to vector<8x1xf32>
    %8 = tpu.concatenate %5, %7 in 1 : vector<8x1xf32>, vector<8x1xf32> -> vector<8x2xf32>
    %c0_4 = arith.constant 0 : index
    %c0_5 = arith.constant 0 : index
    %9 = vector.load %arg2[%c0_4, %c0_5] : memref<4x8xf32, #tpu.memory_space<vmem>>, vector<4x8xf32>
    %cst_6 = arith.constant dense<0.000000e+00> : vector<4x2xf32>
    %10 = tpu.matmul %9, %8, %cst_6 {dimension_numbers = #tpu.dot_dimension_numbers<[1], [0], [0], [1], [0, 0, 1, 1], [], []>, precision = #tpu.contract_precision<fp32>} : vector<4x8xf32>, vector<8x2xf32>, vector<4x2xf32> -> vector<4x2xf32>
    %c0_7 = arith.constant 0 : index
    %c0_8 = arith.constant 0 : index
    %11 = vector.load %arg3[%c0_7, %c0_8] : memref<4x1xf32, #tpu.memory_space<vmem>>, vector<4x1xf32>
    %12 = vector.broadcast %11 : vector<4x1xf32> to vector<4x2xf32>
    %13 = arith.addf %10, %12 : vector<4x2xf32>
    %cst_9 = arith.constant 0.000000e+00 : f32
    %14 = vector.broadcast %cst_9 : f32 to vector<4x2xf32>
    %15 = arith.maximumf %13, %14 : vector<4x2xf32>
    %c0_10 = arith.constant 0 : index
    %c0_11 = arith.constant 0 : index
    %16 = vector.load %arg4[%c0_10, %c0_11] : memref<8x4xf32, #tpu.memory_space<vmem>>, vector<8x4xf32>
    %cst_12 = arith.constant dense<0.000000e+00> : vector<8x2xf32>
    %17 = tpu.matmul %16, %15, %cst_12 {dimension_numbers = #tpu.dot_dimension_numbers<[1], [0], [0], [1], [0, 0, 1, 1], [], []>, precision = #tpu.contract_precision<fp32>} : vector<8x4xf32>, vector<4x2xf32>, vector<8x2xf32> -> vector<8x2xf32>
    %c0_13 = arith.constant 0 : index
    %c0_14 = arith.constant 0 : index
    %18 = vector.load %arg5[%c0_13, %c0_14] : memref<8x1xf32, #tpu.memory_space<vmem>>, vector<8x1xf32>
    %19 = vector.broadcast %18 : vector<8x1xf32> to vector<8x2xf32>
    %20 = arith.addf %17, %19 : vector<8x2xf32>
    %21 = vector.extract_strided_slice %20 {offsets = [0, 0], sizes = [8, 1], strides = [1, 1]} : vector<8x2xf32> to vector<8x1xf32>
    %22 = vector.extract_strided_slice %20 {offsets = [0, 1], sizes = [8, 1], strides = [1, 1]} : vector<8x2xf32> to vector<8x1xf32>
    %23 = arith.addf %21, %22 : vector<8x1xf32>
    %24 = arith.negf %23 : vector<8x1xf32>
    %25 = math.exp %24 : vector<8x1xf32>
    %cst_15 = arith.constant 1.000000e+00 : f32
    %26 = vector.broadcast %cst_15 : f32 to vector<8x1xf32>
    %27 = arith.addf %26, %25 : vector<8x1xf32>
    %28 = arith.divf %26, %27 : vector<8x1xf32>
    %c0_16 = arith.constant 0 : index
    %c0_17 = arith.constant 0 : index
    %29 = vector.load %arg8[%c0_16, %c0_17] : memref<7x16xf32, #tpu.memory_space<vmem>>, vector<7x16xf32>
    %c0_18 = arith.constant 0 : index
    %c0_19 = arith.constant 0 : index
    %30 = vector.load %arg6[%c0_18, %c0_19] : memref<7x256xf32, #tpu.memory_space<vmem>>, vector<7x256xf32>
    %c0_20 = arith.constant 0 : index
    %c0_21 = arith.constant 0 : index
    %31 = vector.load %arg7[%c0_20, %c0_21] : memref<7x256xf32, #tpu.memory_space<vmem>>, vector<7x256xf32>
    %c0_22 = arith.constant 0 : index
    %32 = memref.load %arg9[%c0_22] : memref<1xf32, #tpu.memory_space<smem>>
    %cst_23 = arith.constant 0.000000e+00 : f32
    %33 = vector.broadcast %cst_23 : f32 to vector<2x256xf32>
    %c0_24 = arith.constant 0 : index
    %c0_25 = arith.constant 0 : index
    %c0_26 = arith.constant 0 : index
    %34 = vector.load %arg1[%c0_24, %c0_25, %c0_26] : memref<1x8x256xf32, #tpu.memory_space<vmem>>, vector<1x8x256xf32>
    %35 = vector.shape_cast %34 : vector<1x8x256xf32> to vector<8x256xf32>
    %36 = vector.broadcast %28 : vector<8x1xf32> to vector<8x256xf32>
    %37 = arith.mulf %35, %36 : vector<8x256xf32>
    %cst_27 = arith.constant dense<0xFF800000> : vector<256xf32>
    %38 = vector.multi_reduction <maximumf>, %37, %cst_27 [0] : vector<8x256xf32> to vector<256xf32>
    %39 = vector.shape_cast %38 : vector<256xf32> to vector<1x256xf32>
    %cst_28 = arith.constant dense<0.000000e+00> : vector<256xf32>
    %40 = vector.multi_reduction <add>, %37, %cst_28 [0] : vector<8x256xf32> to vector<256xf32>
    %41 = vector.shape_cast %40 : vector<256xf32> to vector<1x256xf32>
    %cst_29 = arith.constant 1.250000e-01 : f32
    %42 = vector.broadcast %cst_29 : f32 to vector<1x256xf32>
    %43 = arith.mulf %41, %42 : vector<1x256xf32>
    %44 = tpu.concatenate %39, %43 in 0 : vector<1x256xf32>, vector<1x256xf32> -> vector<2x256xf32>
    %c48_i32 = arith.constant 48 : i32
    %45 = tpu.dynamic_rotate %44 by %c48_i32 dim 1 : vector<2x256xf32>, i32 -> vector<2x256xf32>
    %46 = vector.extract_strided_slice %30 {offsets = [0, 0], sizes = [1, 256], strides = [1, 1]} : vector<7x256xf32> to vector<1x256xf32>
    %47 = vector.broadcast %46 : vector<1x256xf32> to vector<2x256xf32>
    %48 = arith.mulf %45, %47 : vector<2x256xf32>
    %c32_i32 = arith.constant 32 : i32
    %49 = tpu.dynamic_rotate %44 by %c32_i32 dim 1 : vector<2x256xf32>, i32 -> vector<2x256xf32>
    %50 = vector.extract_strided_slice %30 {offsets = [1, 0], sizes = [1, 256], strides = [1, 1]} : vector<7x256xf32> to vector<1x256xf32>
    %51 = vector.broadcast %50 : vector<1x256xf32> to vector<2x256xf32>
    %52 = arith.mulf %49, %51 : vector<2x256xf32>
    %c16_i32 = arith.constant 16 : i32
    %53 = tpu.dynamic_rotate %44 by %c16_i32 dim 1 : vector<2x256xf32>, i32 -> vector<2x256xf32>
    %54 = vector.extract_strided_slice %30 {offsets = [2, 0], sizes = [1, 256], strides = [1, 1]} : vector<7x256xf32> to vector<1x256xf32>
    %55 = vector.broadcast %54 : vector<1x256xf32> to vector<2x256xf32>
    %56 = arith.mulf %53, %55 : vector<2x256xf32>
    %c240_i32 = arith.constant 240 : i32
    %57 = tpu.dynamic_rotate %44 by %c240_i32 dim 1 : vector<2x256xf32>, i32 -> vector<2x256xf32>
    %58 = vector.extract_strided_slice %30 {offsets = [4, 0], sizes = [1, 256], strides = [1, 1]} : vector<7x256xf32> to vector<1x256xf32>
    %59 = vector.broadcast %58 : vector<1x256xf32> to vector<2x256xf32>
    %60 = arith.mulf %57, %59 : vector<2x256xf32>
    %c224_i32 = arith.constant 224 : i32
    %61 = tpu.dynamic_rotate %44 by %c224_i32 dim 1 : vector<2x256xf32>, i32 -> vector<2x256xf32>
    %62 = vector.extract_strided_slice %30 {offsets = [5, 0], sizes = [1, 256], strides = [1, 1]} : vector<7x256xf32> to vector<1x256xf32>
    %63 = vector.broadcast %62 : vector<1x256xf32> to vector<2x256xf32>
    %64 = arith.mulf %61, %63 : vector<2x256xf32>
    %c208_i32 = arith.constant 208 : i32
    %65 = tpu.dynamic_rotate %44 by %c208_i32 dim 1 : vector<2x256xf32>, i32 -> vector<2x256xf32>
    %66 = vector.extract_strided_slice %30 {offsets = [6, 0], sizes = [1, 256], strides = [1, 1]} : vector<7x256xf32> to vector<1x256xf32>
    %67 = vector.broadcast %66 : vector<1x256xf32> to vector<2x256xf32>
    %68 = arith.mulf %65, %67 : vector<2x256xf32>
    %69 = tpu.concatenate %48, %52, %56, %44, %60, %64, %68, %33 in 0 : vector<2x256xf32>, vector<2x256xf32>, vector<2x256xf32>, vector<2x256xf32>, vector<2x256xf32>, vector<2x256xf32>, vector<2x256xf32>, vector<2x256xf32> -> vector<16x256xf32>
    %cst_30 = arith.constant dense<0.000000e+00> : vector<7x256xf32>
    %70 = tpu.matmul %29, %69, %cst_30 {dimension_numbers = #tpu.dot_dimension_numbers<[1], [0], [0], [1], [0, 0, 1, 1], [], []>, precision = #tpu.contract_precision<fp32>} : vector<7x16xf32>, vector<16x256xf32>, vector<7x256xf32> -> vector<7x256xf32>
    %71 = vector.extract_strided_slice %70 {offsets = [3, 0], sizes = [1, 256], strides = [1, 1]} : vector<7x256xf32> to vector<1x256xf32>
    %72 = vector.extract_strided_slice %70 {offsets = [0, 0], sizes = [1, 256], strides = [1, 1]} : vector<7x256xf32> to vector<1x256xf32>
    %c3_i32 = arith.constant 3 : i32
    %73 = tpu.dynamic_rotate %72 by %c3_i32 dim 1 : vector<1x256xf32>, i32 -> vector<1x256xf32>
    %74 = vector.extract_strided_slice %31 {offsets = [0, 0], sizes = [1, 256], strides = [1, 1]} : vector<7x256xf32> to vector<1x256xf32>
    %75 = arith.mulf %73, %74 : vector<1x256xf32>
    %76 = arith.addf %71, %75 : vector<1x256xf32>
    %77 = vector.extract_strided_slice %70 {offsets = [1, 0], sizes = [1, 256], strides = [1, 1]} : vector<7x256xf32> to vector<1x256xf32>
    %c2_i32 = arith.constant 2 : i32
    %78 = tpu.dynamic_rotate %77 by %c2_i32 dim 1 : vector<1x256xf32>, i32 -> vector<1x256xf32>
    %79 = vector.extract_strided_slice %31 {offsets = [1, 0], sizes = [1, 256], strides = [1, 1]} : vector<7x256xf32> to vector<1x256xf32>
    %80 = arith.mulf %78, %79 : vector<1x256xf32>
    %81 = arith.addf %76, %80 : vector<1x256xf32>
    %82 = vector.extract_strided_slice %70 {offsets = [2, 0], sizes = [1, 256], strides = [1, 1]} : vector<7x256xf32> to vector<1x256xf32>
    %c1_i32 = arith.constant 1 : i32
    %83 = tpu.dynamic_rotate %82 by %c1_i32 dim 1 : vector<1x256xf32>, i32 -> vector<1x256xf32>
    %84 = vector.extract_strided_slice %31 {offsets = [2, 0], sizes = [1, 256], strides = [1, 1]} : vector<7x256xf32> to vector<1x256xf32>
    %85 = arith.mulf %83, %84 : vector<1x256xf32>
    %86 = arith.addf %81, %85 : vector<1x256xf32>
    %87 = vector.extract_strided_slice %70 {offsets = [4, 0], sizes = [1, 256], strides = [1, 1]} : vector<7x256xf32> to vector<1x256xf32>
    %c255_i32 = arith.constant 255 : i32
    %88 = tpu.dynamic_rotate %87 by %c255_i32 dim 1 : vector<1x256xf32>, i32 -> vector<1x256xf32>
    %89 = vector.extract_strided_slice %31 {offsets = [4, 0], sizes = [1, 256], strides = [1, 1]} : vector<7x256xf32> to vector<1x256xf32>
    %90 = arith.mulf %88, %89 : vector<1x256xf32>
    %91 = arith.addf %86, %90 : vector<1x256xf32>
    %92 = vector.extract_strided_slice %70 {offsets = [5, 0], sizes = [1, 256], strides = [1, 1]} : vector<7x256xf32> to vector<1x256xf32>
    %c254_i32 = arith.constant 254 : i32
    %93 = tpu.dynamic_rotate %92 by %c254_i32 dim 1 : vector<1x256xf32>, i32 -> vector<1x256xf32>
    %94 = vector.extract_strided_slice %31 {offsets = [5, 0], sizes = [1, 256], strides = [1, 1]} : vector<7x256xf32> to vector<1x256xf32>
    %95 = arith.mulf %93, %94 : vector<1x256xf32>
    %96 = arith.addf %91, %95 : vector<1x256xf32>
    %97 = vector.extract_strided_slice %70 {offsets = [6, 0], sizes = [1, 256], strides = [1, 1]} : vector<7x256xf32> to vector<1x256xf32>
    %c253_i32 = arith.constant 253 : i32
    %98 = tpu.dynamic_rotate %97 by %c253_i32 dim 1 : vector<1x256xf32>, i32 -> vector<1x256xf32>
    %99 = vector.extract_strided_slice %31 {offsets = [6, 0], sizes = [1, 256], strides = [1, 1]} : vector<7x256xf32> to vector<1x256xf32>
    %100 = arith.mulf %98, %99 : vector<1x256xf32>
    %101 = arith.addf %96, %100 : vector<1x256xf32>
    %102 = vector.broadcast %32 : f32 to vector<1x256xf32>
    %103 = arith.addf %101, %102 : vector<1x256xf32>
    %104 = arith.negf %103 : vector<1x256xf32>
    %105 = math.exp %104 : vector<1x256xf32>
    %cst_31 = arith.constant 1.000000e+00 : f32
    %106 = vector.broadcast %cst_31 : f32 to vector<1x256xf32>
    %107 = arith.addf %106, %105 : vector<1x256xf32>
    %108 = arith.divf %106, %107 : vector<1x256xf32>
    %109 = vector.broadcast %108 : vector<1x256xf32> to vector<8x256xf32>
    %110 = arith.mulf %37, %109 : vector<8x256xf32>
    %c0_32 = arith.constant 0 : index
    %c0_33 = arith.constant 0 : index
    %c0_34 = arith.constant 0 : index
    %111 = vector.load %arg10[%c0_32, %c0_33, %c0_34] : memref<1x8x256xf32, #tpu.memory_space<vmem>>, vector<1x8x256xf32>
    %112 = vector.shape_cast %111 : vector<1x8x256xf32> to vector<8x256xf32>
    %113 = vector.shape_cast %110 : vector<8x256xf32> to vector<1x8x256xf32>
    tpu.vector_store %arg10[%c0_32, %c0_33, %c0_34], %113 {strides = array<i32>} : memref<1x8x256xf32, #tpu.memory_space<vmem>>, vector<1x8x256xf32>,
    return
  }
  func.func @transform_0(%arg0: i32) -> (i32, i32, i32) {
    %c0_i32 = arith.constant 0 : i32
    %c0_i32_0 = arith.constant 0 : i32
    %c0_i32_1 = arith.constant 0 : i32
    return %arg0, %c0_i32, %c0_i32_0 : i32, i32, i32
  }
  func.func @transform_1(%arg0: i32) -> (i32, i32) {
    %c0_i32 = arith.constant 0 : i32
    %c0_i32_0 = arith.constant 0 : i32
    %c0_i32_1 = arith.constant 0 : i32
    return %c0_i32, %c0_i32_0 : i32, i32
  }
  func.func @transform_2(%arg0: i32) -> (i32, i32) {
    %c0_i32 = arith.constant 0 : i32
    %c0_i32_0 = arith.constant 0 : i32
    %c0_i32_1 = arith.constant 0 : i32
    return %c0_i32, %c0_i32_0 : i32, i32
  }
  func.func @transform_3(%arg0: i32) -> (i32, i32) {
    %c0_i32 = arith.constant 0 : i32
    %c0_i32_0 = arith.constant 0 : i32
    %c0_i32_1 = arith.constant 0 : i32
    return %c0_i32, %c0_i32_0 : i32, i32
  }
  func.func @transform_4(%arg0: i32) -> (i32, i32) {
    %c0_i32 = arith.constant 0 : i32
    %c0_i32_0 = arith.constant 0 : i32
    %c0_i32_1 = arith.constant 0 : i32
    return %c0_i32, %c0_i32_0 : i32, i32
  }
  func.func @transform_5(%arg0: i32) -> (i32, i32) {
    %c0_i32 = arith.constant 0 : i32
    %c0_i32_0 = arith.constant 0 : i32
    %c0_i32_1 = arith.constant 0 : i32
    return %c0_i32, %c0_i32_0 : i32, i32
  }
  func.func @transform_6(%arg0: i32) -> (i32, i32) {
    %c0_i32 = arith.constant 0 : i32
    %c0_i32_0 = arith.constant 0 : i32
    %c0_i32_1 = arith.constant 0 : i32
    return %c0_i32, %c0_i32_0 : i32, i32
  }
  func.func @transform_7(%arg0: i32) -> (i32, i32) {
    %c0_i32 = arith.constant 0 : i32
    %c0_i32_0 = arith.constant 0 : i32
    %c0_i32_1 = arith.constant 0 : i32
    return %c0_i32, %c0_i32_0 : i32, i32
  }
  func.func @transform_8(%arg0: i32) -> i32 {
    %c0_i32 = arith.constant 0 : i32
    %c0_i32_0 = arith.constant 0 : i32
    return %c0_i32 : i32
  }
  func.func @transform_9(%arg0: i32) -> (i32, i32, i32) {
    %c0_i32 = arith.constant 0 : i32
    %c0_i32_0 = arith.constant 0 : i32
    %c0_i32_1 = arith.constant 0 : i32
    return %arg0, %c0_i32, %c0_i32_0 : i32, i32, i32
  }
}

</mosaic_0001>

<llo_original>
// kernel: tpu_custom_call.1
$region0: #{tpu_custom_call.1}
  #allocation0 [shape = 'u32[]', space=smem, size = 0x4, offset = 0x4, fixed_abs, tag = 'smem constant byte address 0x4 - core index']
  #allocation1 [shape = 'u32[144,128]{1,0:T(1,128)}', space=vmem, size = 0x12000, scoped, tag = 'internal scratch']
  #allocation2 [shape = 'f32[1]{0:T(128)S(6)}', space=smem, size = 0x200, scoped, tag = 'scoped memory for tpu_custom_call.1']
  %s0 = inlined_call_operand.hbm [shape: f32[2,8,256], index: 0, kind: input, shape index: {}]
  %s1 = inlined_call_operand.hbm [shape: f32[4,8], index: 1, kind: input, shape index: {}]
  %s2 = inlined_call_operand.vmem [shape: f32[4,1], index: 2, kind: input, shape index: {}]
  %s3 = inlined_call_operand.vmem [shape: f32[8,4], index: 3, kind: input, shape index: {}]
  %s4 = inlined_call_operand.vmem [shape: f32[8,1], index: 4, kind: input, shape index: {}]
  %s5 = inlined_call_operand.vmem [shape: f32[7,256], index: 5, kind: input, shape index: {}]
  %s6 = inlined_call_operand.vmem [shape: f32[7,256], index: 6, kind: input, shape index: {}]
  %s7 = inlined_call_operand.vmem [shape: f32[7,16], index: 7, kind: input, shape index: {}]
  %s8 = inlined_call_operand.<no memory space> [shape: f32[1], index: 8, kind: input, shape index: {}]
  %s9 = inlined_call_operand.hbm [shape: f32[2,8,256], index: 9, kind: output, shape index: {}]
  %s10 = sld [smem:[#allocation0]]
  $region77: #{tpu_custom_call.1} parent=0
    _
  %s12 = ssub.s32 1, %s10
  %s13 = scalar_select 0, %s12, %s10
  %14 = sst [smem:[#allocation2]] %s8
  $region1: #{tpu_custom_call.1} parent=0
    #allocation3 [shape = 'u8[16384]{0}', space=vmem, size = 0x4000, scoped, tag = 'input window, operand 0']
    #allocation4 [shape = 's32[2]{0}', space=sflag, size = 0x8, scoped, tag = 'scoped memory for tpu_custom_call.1']
    #allocation5 [shape = 's32[2]{0}', space=sflag, size = 0x8, scoped, tag = 'scoped memory for tpu_custom_call.1']
    #allocation6 [shape = 'u8[2048]{0}', space=vmem, size = 0x800, scoped, tag = 'input window, operand 1, single buffered']
    #allocation7 [shape = 's32[1]{0}', space=sflag, size = 0x4, scoped, tag = 'scoped memory for tpu_custom_call.1']
    #allocation8 [shape = 'u8[16384]{0}', space=vmem, size = 0x4000, scoped, tag = 'output window, operand 0']
    %15 = vsyncpa [#allocation4], 0
    %s16 = scalar_lea.sflag [#allocation4], 1
    %17 = vsyncpa %s16, 0
    %18 = vsyncpa [#allocation7], 0
    %19 = vsyncpa [#allocation5], 0
    %s20 = scalar_lea.sflag [#allocation5], 1
    %21 = vsyncpa %s20, 0
    loop: start=0, step=1, limit=4
    $region2: #{tpu_custom_call.1} parent=1 // loop_pre_header
      _
    $region3: #{tpu_custom_call.1} parent=1 // loop_header
      %s23 = sphi 0, %s27
      %p24 = scmp.ge.s32.totalorder %s23, 4
      %s33 = sphi 0, %s35
      %s36 = sphi 0, %s33
      %s37 = sphi 0, %s36
      %s53 = sphi 0, %s37
      %s57 = sphi 0, %s57
      %s59 = sphi 0, %s57
      %s60 = sphi 0, %s59
      %s74 = sphi 0, %s60
      %s78 = sphi 0, %s78
      %s80 = sphi 0, %s78
      %s81 = sphi 0, %s80
      %s95 = sphi 0, %s81
      %s99 = sphi 0, %s99
      %s101 = sphi 0, %s99
      %s102 = sphi 0, %s101
      %s116 = sphi 0, %s102
      %s120 = sphi 0, %s120
      %s122 = sphi 0, %s120
      %s123 = sphi 0, %s122
      %s137 = sphi 0, %s123
      %s141 = sphi 0, %s141
      %s143 = sphi 0, %s141
      %s144 = sphi 0, %s143
      %s158 = sphi 0, %s144
      %s162 = sphi 0, %s162
      %s164 = sphi 0, %s162
      %s165 = sphi 0, %s164
      %s179 = sphi 0, %s165
      %s183 = sphi 0, %s183
      %s185 = sphi 0, %s183
      %s186 = sphi 0, %s185
      %s200 = sphi 0, %s186
      %s204 = sphi 0, %s204
      %s206 = sphi 0, %s204
      %s207 = sphi 0, %s206
      %s221 = sphi 0, %s207
      %s227 = sphi 0, %s229
      %s230 = sphi 0, %s227
      %s231 = sphi 0, %s230
      %s247 = sphi 0, %s231
    $region4: #{tpu_custom_call.1} parent=1 // loop_header_branch
      %26 = sbr.rel (%p24) target = $region8
    $region5: #{tpu_custom_call.1} parent=1 // loop_body
      %s28 = ssub.s32 %s23, 1
      %s29 = ssub.s32 %s23, 2
      %s30 = sadd.s32 %s23, 1
      %s31 = ssub.s32 %s23, %s30
      %p32 = scmp.eq.s32.totalorder %s31, 0
      %s34 = sadd.s32 %s33, 1
      %s35 = scalar_select %p32, %s33, %s34
      %p38 = pneg %p32
      %p39 = scmp.eq.s32.totalorder %s23, 1
      %p40 = por %p38, %p39
      %p41 = scmp.ne.s32.totalorder %s33, %s36
      %p42 = scmp.eq.s32.totalorder %s23, 0
      %p43 = por %p41, %p42
      %p44 = scmp.ne.s32.totalorder %s33, %s36
      %p45 = scmp.eq.s32.totalorder %s28, 1
      %p46 = por %p44, %p45
      %p47 = scmp.ne.s32.totalorder %s36, %s37
      %p48 = scmp.eq.s32.totalorder %s28, 0
      %p49 = por %p47, %p48
      %p50 = scmp.ne.s32.totalorder %s36, %s37
      %p51 = scmp.eq.s32.totalorder %s29, 1
      %p52 = por %p50, %p51
      %p54 = scmp.ne.s32.totalorder %s37, %s53
      %p55 = scmp.eq.s32.totalorder %s29, 0
      %p56 = por %p54, %p55
      %s58 = sadd.s32 %s57, 1
      %p61 = scmp.eq.s32.totalorder %s23, 1
      %p62 = scmp.ne.s32.totalorder %s57, %s59
      %p63 = scmp.eq.s32.totalorder %s23, 0
      %p64 = por %p62, %p63
      %p65 = scmp.ne.s32.totalorder %s57, %s59
      %p66 = scmp.eq.s32.totalorder %s28, 1
      %p67 = por %p65, %p66
      %p68 = scmp.ne.s32.totalorder %s59, %s60
      %p69 = scmp.eq.s32.totalorder %s28, 0
      %p70 = por %p68, %p69
      %p71 = scmp.ne.s32.totalorder %s59, %s60
      %p72 = scmp.eq.s32.totalorder %s29, 1
      %p73 = por %p71, %p72
      %p75 = scmp.ne.s32.totalorder %s60, %s74
      %p76 = scmp.eq.s32.totalorder %s29, 0
      %p77 = por %p75, %p76
      %s79 = sadd.s32 %s78, 1
      %p82 = scmp.eq.s32.totalorder %s23, 1
      %p83 = scmp.ne.s32.totalorder %s78, %s80
      %p84 = scmp.eq.s32.totalorder %s23, 0
      %p85 = por %p83, %p84
      %p86 = scmp.ne.s32.totalorder %s78, %s80
      %p87 = scmp.eq.s32.totalorder %s28, 1
      %p88 = por %p86, %p87
      %p89 = scmp.ne.s32.totalorder %s80, %s81
      %p90 = scmp.eq.s32.totalorder %s28, 0
      %p91 = por %p89, %p90
      %p92 = scmp.ne.s32.totalorder %s80, %s81
      %p93 = scmp.eq.s32.totalorder %s29, 1
      %p94 = por %p92, %p93
      %p96 = scmp.ne.s32.totalorder %s81, %s95
      %p97 = scmp.eq.s32.totalorder %s29, 0
      %p98 = por %p96, %p97
      %s100 = sadd.s32 %s99, 1
      %p103 = scmp.eq.s32.totalorder %s23, 1
      %p104 = scmp.ne.s32.totalorder %s99, %s101
      %p105 = scmp.eq.s32.totalorder %s23, 0
      %p106 = por %p104, %p105
      %p107 = scmp.ne.s32.totalorder %s99, %s101
      %p108 = scmp.eq.s32.totalorder %s28, 1
      %p109 = por %p107, %p108
      %p110 = scmp.ne.s32.totalorder %s101, %s102
      %p111 = scmp.eq.s32.totalorder %s28, 0
      %p112 = por %p110, %p111
      %p113 = scmp.ne.s32.totalorder %s101, %s102
      %p114 = scmp.eq.s32.totalorder %s29, 1
      %p115 = por %p113, %p114
      %p117 = scmp.ne.s32.totalorder %s102, %s116
      %p118 = scmp.eq.s32.totalorder %s29, 0
      %p119 = por %p117, %p118
      %s121 = sadd.s32 %s120, 1
      %p124 = scmp.eq.s32.totalorder %s23, 1
      %p125 = scmp.ne.s32.totalorder %s120, %s122
      %p126 = scmp.eq.s32.totalorder %s23, 0
      %p127 = por %p125, %p126
      %p128 = scmp.ne.s32.totalorder %s120, %s122
      %p129 = scmp.eq.s32.totalorder %s28, 1
      %p130 = por %p128, %p129
      %p131 = scmp.ne.s32.totalorder %s122, %s123
      %p132 = scmp.eq.s32.totalorder %s28, 0
      %p133 = por %p131, %p132
      %p134 = scmp.ne.s32.totalorder %s122, %s123
      %p135 = scmp.eq.s32.totalorder %s29, 1
      %p136 = por %p134, %p135
      %p138 = scmp.ne.s32.totalorder %s123, %s137
      %p139 = scmp.eq.s32.totalorder %s29, 0
      %p140 = por %p138, %p139
      %s142 = sadd.s32 %s141, 1
      %p145 = scmp.eq.s32.totalorder %s23, 1
      %p146 = scmp.ne.s32.totalorder %s141, %s143
      %p147 = scmp.eq.s32.totalorder %s23, 0
      %p148 = por %p146, %p147
      %p149 = scmp.ne.s32.totalorder %s141, %s143
      %p150 = scmp.eq.s32.totalorder %s28, 1
      %p151 = por %p149, %p150
      %p152 = scmp.ne.s32.totalorder %s143, %s144
      %p153 = scmp.eq.s32.totalorder %s28, 0
      %p154 = por %p152, %p153
      %p155 = scmp.ne.s32.totalorder %s143, %s144
      %p156 = scmp.eq.s32.totalorder %s29, 1
      %p157 = por %p155, %p156
      %p159 = scmp.ne.s32.totalorder %s144, %s158
      %p160 = scmp.eq.s32.totalorder %s29, 0
      %p161 = por %p159, %p160
      %s163 = sadd.s32 %s162, 1
      %p166 = scmp.eq.s32.totalorder %s23, 1
      %p167 = scmp.ne.s32.totalorder %s162, %s164
      %p168 = scmp.eq.s32.totalorder %s23, 0
      %p169 = por %p167, %p168
      %p170 = scmp.ne.s32.totalorder %s162, %s164
      %p171 = scmp.eq.s32.totalorder %s28, 1
      %p172 = por %p170, %p171
      %p173 = scmp.ne.s32.totalorder %s164, %s165
      %p174 = scmp.eq.s32.totalorder %s28, 0
      %p175 = por %p173, %p174
      %p176 = scmp.ne.s32.totalorder %s164, %s165
      %p177 = scmp.eq.s32.totalorder %s29, 1
      %p178 = por %p176, %p177
      %p180 = scmp.ne.s32.totalorder %s165, %s179
      %p181 = scmp.eq.s32.totalorder %s29, 0
      %p182 = por %p180, %p181
      %s184 = sadd.s32 %s183, 1
      %p187 = scmp.eq.s32.totalorder %s23, 1
      %p188 = scmp.ne.s32.totalorder %s183, %s185
      %p189 = scmp.eq.s32.totalorder %s23, 0
      %p190 = por %p188, %p189
      %p191 = scmp.ne.s32.totalorder %s183, %s185
      %p192 = scmp.eq.s32.totalorder %s28, 1
      %p193 = por %p191, %p192
      %p194 = scmp.ne.s32.totalorder %s185, %s186
      %p195 = scmp.eq.s32.totalorder %s28, 0
      %p196 = por %p194, %p195
      %p197 = scmp.ne.s32.totalorder %s185, %s186
      %p198 = scmp.eq.s32.totalorder %s29, 1
      %p199 = por %p197, %p198
      %p201 = scmp.ne.s32.totalorder %s186, %s200
      %p202 = scmp.eq.s32.totalorder %s29, 0
      %p203 = por %p201, %p202
      %s205 = sadd.s32 %s204, 1
      %p208 = scmp.eq.s32.totalorder %s23, 1
      %p209 = scmp.ne.s32.totalorder %s204, %s206
      %p210 = scmp.eq.s32.totalorder %s23, 0
      %p211 = por %p209, %p210
      %p212 = scmp.ne.s32.totalorder %s204, %s206
      %p213 = scmp.eq.s32.totalorder %s28, 1
      %p214 = por %p212, %p213
      %p215 = scmp.ne.s32.totalorder %s206, %s207
      %p216 = scmp.eq.s32.totalorder %s28, 0
      %p217 = por %p215, %p216
      %p218 = scmp.ne.s32.totalorder %s206, %s207
      %p219 = scmp.eq.s32.totalorder %s29, 1
      %p220 = por %p218, %p219
      %p222 = scmp.ne.s32.totalorder %s207, %s221
      %p223 = scmp.eq.s32.totalorder %s29, 0
      %p224 = por %p222, %p223
      %s225 = ssub.s32 %s23, %s30
      %p226 = scmp.eq.s32.totalorder %s225, 0
      %s228 = sadd.s32 %s227, 1
      %s229 = scalar_select %p226, %s227, %s228
      %p232 = pneg %p226
      %p233 = scmp.eq.s32.totalorder %s23, 1
      %p234 = por %p232, %p233
      %p235 = scmp.ne.s32.totalorder %s227, %s230
      %p236 = scmp.eq.s32.totalorder %s23, 0
      %p237 = por %p235, %p236
      %p238 = scmp.ne.s32.totalorder %s227, %s230
      %p239 = scmp.eq.s32.totalorder %s28, 1
      %p240 = por %p238, %p239
      %p241 = scmp.ne.s32.totalorder %s230, %s231
      %p242 = scmp.eq.s32.totalorder %s28, 0
      %p243 = por %p241, %p242
      %p244 = scmp.ne.s32.totalorder %s230, %s231
      %p245 = scmp.eq.s32.totalorder %s29, 1
      %p246 = por %p244, %p245
      %p248 = scmp.ne.s32.totalorder %s231, %s247
      %p249 = scmp.eq.s32.totalorder %s29, 0
      %p250 = por %p248, %p249
      %p251 = scmp.le.s32.totalorder 1, %s23
      %p252 = scmp.lt.s32.totalorder %s23, 3
      %p253 = pnand %p251, %p252
      %p254 = pneg %p253
      // Predicated region
      $region9: #{tpu_custom_call.1} parent=5 // pred_check
        _
      $region10: #{tpu_custom_call.1} parent=5 // pred_check_branch
        %256 = sbr.rel (%p253) target = $region12
      $region11: #{tpu_custom_call.1} parent=5 // pred_region
        %s257 = ssub.s32 %s23, 1
        // Predicated region
        $region13: #{tpu_custom_call.1} parent=11 // pred_check
          %p258 = pneg %p70
        $region14: #{tpu_custom_call.1} parent=11 // pred_check_branch
          %260 = sbr.rel (%p258) target = $region16
        $region15: #{tpu_custom_call.1} parent=11 // pred_region
          %s262 = ssub.s32 64, 64
          %263 = vsyncadd [#allocation7], %s262
          %s265 = sshll.u32 [#allocation6], 4
          %s266 = int_to_ptr.vmem [resolvable:$true] %s265
          %268 = dma.hbm_to_vmem [thread:$0]  %s1, 64, %s266, [#allocation7]
        $region16: #{tpu_custom_call.1} parent=11 // pred_fallthru
          _
        // Predicated region
        $region17: #{tpu_custom_call.1} parent=11 // pred_check
          %p269 = pneg %p91
        $region18: #{tpu_custom_call.1} parent=11 // pred_check_branch
          %271 = sbr.rel (%p269) target = $region20
        $region19: #{tpu_custom_call.1} parent=11 // pred_region
          _
        $region20: #{tpu_custom_call.1} parent=11 // pred_fallthru
          _
        // Predicated region
        $region21: #{tpu_custom_call.1} parent=11 // pred_check
          %p272 = pneg %p112
        $region22: #{tpu_custom_call.1} parent=11 // pred_check_branch
          %274 = sbr.rel (%p272) target = $region24
        $region23: #{tpu_custom_call.1} parent=11 // pred_region
          _
        $region24: #{tpu_custom_call.1} parent=11 // pred_fallthru
          _
        // Predicated region
        $region25: #{tpu_custom_call.1} parent=11 // pred_check
          %p275 = pneg %p133
        $region26: #{tpu_custom_call.1} parent=11 // pred_check_branch
          %277 = sbr.rel (%p275) target = $region28
        $region27: #{tpu_custom_call.1} parent=11 // pred_region
          _
        $region28: #{tpu_custom_call.1} parent=11 // pred_fallthru
          _
        // Predicated region
        $region29: #{tpu_custom_call.1} parent=11 // pred_check
          %p278 = pneg %p154
        $region30: #{tpu_custom_call.1} parent=11 // pred_check_branch
          %280 = sbr.rel (%p278) target = $region32
        $region31: #{tpu_custom_call.1} parent=11 // pred_region
          _
        $region32: #{tpu_custom_call.1} parent=11 // pred_fallthru
          _
        // Predicated region
        $region33: #{tpu_custom_call.1} parent=11 // pred_check
          %p281 = pneg %p175
        $region34: #{tpu_custom_call.1} parent=11 // pred_check_branch
          %283 = sbr.rel (%p281) target = $region36
        $region35: #{tpu_custom_call.1} parent=11 // pred_region
          _
        $region36: #{tpu_custom_call.1} parent=11 // pred_fallthru
          _
        // Predicated region
        $region37: #{tpu_custom_call.1} parent=11 // pred_check
          %p284 = pneg %p196
        $region38: #{tpu_custom_call.1} parent=11 // pred_check_branch
          %286 = sbr.rel (%p284) target = $region40
        $region39: #{tpu_custom_call.1} parent=11 // pred_region
          _
        $region40: #{tpu_custom_call.1} parent=11 // pred_fallthru
          _
        // Predicated region
        $region41: #{tpu_custom_call.1} parent=11 // pred_check
          %p287 = pneg %p217
        $region42: #{tpu_custom_call.1} parent=11 // pred_check_branch
          %289 = sbr.rel (%p287) target = $region44
        $region43: #{tpu_custom_call.1} parent=11 // pred_region
          _
        $region44: #{tpu_custom_call.1} parent=11 // pred_fallthru
          _
      $region12: #{tpu_custom_call.1} parent=5 // pred_fallthru
        _
      %p290 = scmp.lt.s32.totalorder %s23, 2
      // Predicated region
      $region45: #{tpu_custom_call.1} parent=5 // pred_check
        %p291 = pneg %p290
      $region46: #{tpu_custom_call.1} parent=5 // pred_check_branch
        %293 = sbr.rel (%p291) target = $region48
      $region47: #{tpu_custom_call.1} parent=5 // pred_region
        // Predicated region
        $region49: #{tpu_custom_call.1} parent=47 // pred_check
          %p294 = pneg %p43
        $region50: #{tpu_custom_call.1} parent=47 // pred_check_branch
          %296 = sbr.rel (%p294) target = $region52
        $region51: #{tpu_custom_call.1} parent=47 // pred_region
          %s297 = sand.u32 %s33, 1
          %s298 = scalar_lea.sflag [#allocation4], %s297
          %s299 = sand.u32 %s33, 1
          %s300 = smul.addr %s299, 16
          %s301 = scalar_lea.vmem [#allocation3], %s300
          %s303 = ssub.s32 256, 256
          %304 = vsyncadd %s298, %s303
          %s305 = smul.addr %s23, 2
          %s306 = smul.addr %s305, 128
          %s307 = scalar_lea.hbm %s0, %s306
          %s309 = sshll.u32 %s301, 4
          %s310 = int_to_ptr.vmem [resolvable:$true] %s309
          %312 = dma.hbm_to_vmem [thread:$0]  %s307, 256, %s310, %s298
        $region52: #{tpu_custom_call.1} parent=47 // pred_fallthru
          _
      $region48: #{tpu_custom_call.1} parent=5 // pred_fallthru
        _
      %p313 = scmp.le.s32.totalorder 1, %s23
      %p314 = scmp.lt.s32.totalorder %s23, 3
      %p315 = pnand %p313, %p314
      %p316 = pneg %p315
      // Predicated region
      $region53: #{tpu_custom_call.1} parent=5 // pred_check
        _
      $region54: #{tpu_custom_call.1} parent=5 // pred_check_branch
        %318 = sbr.rel (%p315) target = $region56
      $region55: #{tpu_custom_call.1} parent=5 // pred_region
        %s319 = ssub.s32 %s23, 1
        %s320 = sand.u32 %s36, 1
        %s321 = scalar_lea.sflag [#allocation4], %s320
        %s322 = sand.u32 %s36, 1
        %s323 = smul.addr %s322, 16
        %s324 = scalar_lea.vmem [#allocation3], %s323
        // Predicated region
        $region57: #{tpu_custom_call.1} parent=55 // pred_check
          %p325 = pneg %p49
        $region58: #{tpu_custom_call.1} parent=55 // pred_check_branch
          %327 = sbr.rel (%p325) target = $region60
        $region59: #{tpu_custom_call.1} parent=55 // pred_region
          %328 = dma.done %s321, 256
        $region60: #{tpu_custom_call.1} parent=55 // pred_fallthru
          _
        // Predicated region
        $region61: #{tpu_custom_call.1} parent=55 // pred_check
          %p329 = pneg %p70
        $region62: #{tpu_custom_call.1} parent=55 // pred_check_branch
          %331 = sbr.rel (%p329) target = $region64
        $region63: #{tpu_custom_call.1} parent=55 // pred_region
          %332 = dma.done [#allocation7], 64
        $region64: #{tpu_custom_call.1} parent=55 // pred_fallthru
          _
        %s333 = sand.u32 %s36, 1
        %s334 = scalar_lea.sflag [#allocation4], %s333
        %s335 = sand.u32 %s36, 1
        %s336 = smul.addr %s335, 16
        %s337 = scalar_lea.vmem [#allocation3], %s336
        %p338 = pneg %p49
        %p339 = pneg %p46
        %p340 = pneg %p70
        %p341 = pneg %p67
        %p342 = pneg %p91
        %p343 = pneg %p88
        %p344 = pneg %p112
        %p345 = pneg %p109
        %p346 = pneg %p133
        %p347 = pneg %p130
        %p348 = pneg %p154
        %p349 = pneg %p151
        %p350 = pneg %p175
        %p351 = pneg %p172
        %p352 = pneg %p196
        %p353 = pneg %p193
        %p354 = pneg %p217
        %p355 = pneg %p214
        %p356 = pneg %p243
        %p357 = pneg %p240
        %s358 = sand.u32 %s230, 1
        %s359 = scalar_lea.sflag [#allocation5], %s358
        %s360 = sand.u32 %s230, 1
        %s361 = smul.addr %s360, 16
        %s362 = scalar_lea.vmem [#allocation8], %s361
        %v363 = vld [vmem:[%s324] sm:$0xff]
        %v364 = vld [vmem:[%s324 + $0x8] sm:$0xff]
        %v365 = vadd.f32 %v363, %v364
        %366 = vadd.xlane.f32.xlu0 %v365
        %v367 = vpop.xlane.xlu0 %366
        %v368 = vmul.f32 %v367, 0.00390625
        %v369 = vmax.f32 %v363, %v364
        %370 = vmax.xlane.f32.xlu0 %v369
        %v371 = vpop.xlane.xlu0 %370
        %vm372 = vcmask 7168
        %v373 = vsel %vm372, %v368, %v371
        %v374 = vld [vmem:[#allocation6] sm:$0xf]
        %v375 = vld [vmem:[%s2] sm:$0xf]
        %377 = vset.pattern.permute.xlu0 0
        %378 = vperm.xlu0 %377, %v375
        %v379 = vpop.permute.xlu0 %378
        %vm381 = vcmask 64512
        %v383 = vsel %vm381, %v374, 0
        %385 = vmatprep.subr.mxu0 0.0
        %v386 = vand.u32 %v373, 4294901760
        %387 = vmatpush1.msra.mxu0 %v386
        %388 = vmatprep.subr.mxu0 0.0
        %389 = vmatpush1.msra.mxu0 0.0
        %390 = vmatprep.subr.mxu0 0.0
        %391 = vmatpush1.msra.mxu0 0.0
        %392 = vmatprep.subr.mxu0 0.0
        %393 = vmatpush1.msra.mxu0 0.0
        %394 = vmatprep.subr.mxu0 0.0
        %395 = vmatpush1.msra.mxu0 0.0
        %396 = vmatprep.subr.mxu0 0.0
        %397 = vmatpush1.msra.mxu0 0.0
        %398 = vmatprep.subr.mxu0 0.0
        %399 = vmatpush1.msra.mxu0 0.0
        %400 = vmatprep.subr.mxu0 0.0
        %401 = vmatpush1.msra.mxu0 0.0
        %402 = vmatprep.subr.mxu0 0.0
        %403 = vmatpush1.msra.mxu0 0.0
        %404 = vmatprep.subr.mxu0 0.0
        %405 = vmatpush1.msra.mxu0 0.0
        %406 = vmatprep.subr.mxu0 0.0
        %407 = vmatpush1.msra.mxu0 0.0
        %408 = vmatprep.subr.mxu0 0.0
        %409 = vmatpush1.msra.mxu0 0.0
        %410 = vmatprep.subr.mxu0 0.0
        %411 = vmatpush1.msra.mxu0 0.0
        %412 = vmatprep.subr.mxu0 0.0
        %413 = vmatpush1.msra.mxu0 0.0
        %414 = vmatprep.subr.mxu0 0.0
        %415 = vmatpush1.msra.mxu0 0.0
        %416 = vmatprep.subr.mxu0 0.0
        %417 = vmatpush1.msra.mxu0 0.0
        %418 = vmatprep.subr.mxu0 0.0
        %419 = vmatpush1.msra.mxu0 0.0
        %420 = vmatprep.subr.mxu0 0.0
        %421 = vmatpush1.msra.mxu0 0.0
        %422 = vmatprep.subr.mxu0 0.0
        %423 = vmatpush1.msra.mxu0 0.0
        %424 = vmatprep.subr.mxu0 0.0
        %425 = vmatpush1.msra.mxu0 0.0
        %426 = vmatprep.subr.mxu0 0.0
        %427 = vmatpush1.msra.mxu0 0.0
        %428 = vmatprep.subr.mxu0 0.0
        %429 = vmatpush1.msra.mxu0 0.0
        %430 = vmatprep.subr.mxu0 0.0
        %431 = vmatpush1.msra.mxu0 0.0
        %432 = vmatprep.subr.mxu0 0.0
        %433 = vmatpush1.msra.mxu0 0.0
        %434 = vmatprep.subr.mxu0 0.0
        %435 = vmatpush1.msra.mxu0 0.0
        %436 = vmatprep.subr.mxu0 0.0
        %437 = vmatpush1.msra.mxu0 0.0
        %438 = vmatprep.subr.mxu0 0.0
        %439 = vmatpush1.msra.mxu0 0.0
        %440 = vmatprep.subr.mxu0 0.0
        %441 = vmatpush1.msra.mxu0 0.0
        %442 = vmatprep.subr.mxu0 0.0
        %443 = vmatpush1.msra.mxu0 0.0
        %444 = vmatprep.subr.mxu0 0.0
        %445 = vmatpush1.msra.mxu0 0.0
        %446 = vmatprep.subr.mxu0 0.0
        %447 = vmatpush1.msra.mxu0 0.0
        %448 = vmatprep.subr.mxu0 0.0
        %449 = vmatpush1.msra.mxu0 0.0
        %450 = vmatprep.mubr.f32.mxu0 0.0
        %v451 = vand.u32 %v383, 4294901760
        %v452 = vsub.f32 %v383, %v451
        %v453 = vand.u32 %v452, 4294901760
        %v454 = vsub.f32 %v452, %v453
        %v455 = vand.u32 %v454, 4294901760
        %456 = vmatmul.mubr.f32.gmra.mrb[0].mxu0 %v455
        %v457 = vpop.f32.mrb[0].mxu0
        %v458 = vadd.f32 %v379, %v457
        %v459 = vpop.f32.mrb[0].mxu0
        %460 = vdwg.mxu0
        %461 = vmatprep.subr.mxu0 0.0
        %v462 = vand.u32 %v373, 4294901760
        %v463 = vsub.f32 %v373, %v462
        %v464 = vand.u32 %v463, 4294901760
        %v465 = vsub.f32 %v463, %v464
        %v466 = vand.u32 %v465, 4294901760
        %467 = vmatpush1.msra.mxu0 %v466
        %468 = vmatprep.subr.mxu0 0.0
        %469 = vmatpush1.msra.mxu0 0.0
        %470 = vmatprep.subr.mxu0 0.0
        %471 = vmatpush1.msra.mxu0 0.0
        %472 = vmatprep.subr.mxu0 0.0
        %473 = vmatpush1.msra.mxu0 0.0
        %474 = vmatprep.subr.mxu0 0.0
        %475 = vmatpush1.msra.mxu0 0.0
        %476 = vmatprep.subr.mxu0 0.0
        %477 = vmatpush1.msra.mxu0 0.0
        %478 = vmatprep.subr.mxu0 0.0
        %479 = vmatpush1.msra.mxu0 0.0
        %480 = vmatprep.subr.mxu0 0.0
        %481 = vmatpush1.msra.mxu0 0.0
        %482 = vmatprep.subr.mxu0 0.0
        %483 = vmatpush1.msra.mxu0 0.0
        %484 = vmatprep.subr.mxu0 0.0
        %485 = vmatpush1.msra.mxu0 0.0
        %486 = vmatprep.subr.mxu0 0.0
        %487 = vmatpush1.msra.mxu0 0.0
        %488 = vmatprep.subr.mxu0 0.0
        %489 = vmatpush1.msra.mxu0 0.0
        %490 = vmatprep.subr.mxu0 0.0
        %491 = vmatpush1.msra.mxu0 0.0
        %492 = vmatprep.subr.mxu0 0.0
        %493 = vmatpush1.msra.mxu0 0.0
        %494 = vmatprep.subr.mxu0 0.0
        %495 = vmatpush1.msra.mxu0 0.0
        %496 = vmatprep.subr.mxu0 0.0
        %497 = vmatpush1.msra.mxu0 0.0
        %498 = vmatprep.subr.mxu0 0.0
        %499 = vmatpush1.msra.mxu0 0.0
        %500 = vmatprep.subr.mxu0 0.0
        %501 = vmatpush1.msra.mxu0 0.0
        %502 = vmatprep.subr.mxu0 0.0
        %503 = vmatpush1.msra.mxu0 0.0
        %504 = vmatprep.subr.mxu0 0.0
        %505 = vmatpush1.msra.mxu0 0.0
        %506 = vmatprep.subr.mxu0 0.0
        %507 = vmatpush1.msra.mxu0 0.0
        %508 = vmatprep.subr.mxu0 0.0
        %509 = vmatpush1.msra.mxu0 0.0
        %510 = vmatprep.subr.mxu0 0.0
        %511 = vmatpush1.msra.mxu0 0.0
        %512 = vmatprep.subr.mxu0 0.0
        %513 = vmatpush1.msra.mxu0 0.0
        %514 = vmatprep.subr.mxu0 0.0
        %515 = vmatpush1.msra.mxu0 0.0
        %516 = vmatprep.subr.mxu0 0.0
        %517 = vmatpush1.msra.mxu0 0.0
        %518 = vmatprep.subr.mxu0 0.0
        %519 = vmatpush1.msra.mxu0 0.0
        %520 = vmatprep.subr.mxu0 0.0
        %521 = vmatpush1.msra.mxu0 0.0
        %522 = vmatprep.subr.mxu0 0.0
        %523 = vmatpush1.msra.mxu0 0.0
        %524 = vmatprep.subr.mxu0 0.0
        %525 = vmatpush1.msra.mxu0 0.0
        %526 = vmatprep.subr.mxu0 0.0
        %527 = vmatpush1.msra.mxu0 0.0
        %528 = vmatprep.subr.mxu0 0.0
        %529 = vmatpush1.msra.mxu0 0.0
        %530 = vmatprep.mubr.f32.mxu0 0.0
        %v531 = vand.u32 %v383, 4294901760
        %532 = vmatmul.mubr.f32.gmra.mrb[0].mxu0 %v531
        %v533 = vpop.f32.mrb[0].mxu0
        %v534 = vadd.f32 %v458, %v533
        %v535 = vpop.f32.mrb[0].mxu0
        %536 = vdwg.mxu0
        %537 = vmatprep.subr.mxu0 0.0
        %v538 = vand.u32 %v373, 4294901760
        %v539 = vsub.f32 %v373, %v538
        %540 = vmatpush1.msra.mxu0 %v539
        %541 = vmatprep.subr.mxu0 0.0
        %542 = vmatpush1.msra.mxu0 0.0
        %543 = vmatprep.subr.mxu0 0.0
        %544 = vmatpush1.msra.mxu0 0.0
        %545 = vmatprep.subr.mxu0 0.0
        %546 = vmatpush1.msra.mxu0 0.0
        %547 = vmatprep.subr.mxu0 0.0
        %548 = vmatpush1.msra.mxu0 0.0
        %549 = vmatprep.subr.mxu0 0.0
        %550 = vmatpush1.msra.mxu0 0.0
        %551 = vmatprep.subr.mxu0 0.0
        %552 = vmatpush1.msra.mxu0 0.0
        %553 = vmatprep.subr.mxu0 0.0
        %554 = vmatpush1.msra.mxu0 0.0
        %555 = vmatprep.subr.mxu0 0.0
        %556 = vmatpush1.msra.mxu0 0.0
        %557 = vmatprep.subr.mxu0 0.0
        %558 = vmatpush1.msra.mxu0 0.0
        %559 = vmatprep.subr.mxu0 0.0
        %560 = vmatpush1.msra.mxu0 0.0
        %561 = vmatprep.subr.mxu0 0.0
        %562 = vmatpush1.msra.mxu0 0.0
        %563 = vmatprep.subr.mxu0 0.0
        %564 = vmatpush1.msra.mxu0 0.0
        %565 = vmatprep.subr.mxu0 0.0
        %566 = vmatpush1.msra.mxu0 0.0
        %567 = vmatprep.subr.mxu0 0.0
        %568 = vmatpush1.msra.mxu0 0.0
        %569 = vmatprep.subr.mxu0 0.0
        %570 = vmatpush1.msra.mxu0 0.0
        %571 = vmatprep.subr.mxu0 0.0
        %572 = vmatpush1.msra.mxu0 0.0
        %573 = vmatprep.subr.mxu0 0.0
        %574 = vmatpush1.msra.mxu0 0.0
        %575 = vmatprep.subr.mxu0 0.0
        %576 = vmatpush1.msra.mxu0 0.0
        %577 = vmatprep.subr.mxu0 0.0
        %578 = vmatpush1.msra.mxu0 0.0
        %579 = vmatprep.subr.mxu0 0.0
        %580 = vmatpush1.msra.mxu0 0.0
        %581 = vmatprep.subr.mxu0 0.0
        %582 = vmatpush1.msra.mxu0 0.0
        %583 = vmatprep.subr.mxu0 0.0
        %584 = vmatpush1.msra.mxu0 0.0
        %585 = vmatprep.subr.mxu0 0.0
        %586 = vmatpush1.msra.mxu0 0.0
        %587 = vmatprep.subr.mxu0 0.0
        %588 = vmatpush1.msra.mxu0 0.0
        %589 = vmatprep.subr.mxu0 0.0
        %590 = vmatpush1.msra.mxu0 0.0
        %591 = vmatprep.subr.mxu0 0.0
        %592 = vmatpush1.msra.mxu0 0.0
        %593 = vmatprep.subr.mxu0 0.0
        %594 = vmatpush1.msra.mxu0 0.0
        %595 = vmatprep.subr.mxu0 0.0
        %596 = vmatpush1.msra.mxu0 0.0
        %597 = vmatprep.subr.mxu0 0.0
        %598 = vmatpush1.msra.mxu0 0.0
        %599 = vmatprep.subr.mxu0 0.0
        %600 = vmatpush1.msra.mxu0 0.0
        %601 = vmatprep.subr.mxu0 0.0
        %602 = vmatpush1.msra.mxu0 0.0
        %603 = vmatprep.mubr.f32.mxu0 0.0
        %v604 = vand.u32 %v383, 4294901760
        %v605 = vsub.f32 %v383, %v604
        %606 = vmatmul.mubr.f32.gmra.mrb[0].mxu0 %v605
        %v607 = vpop.f32.mrb[0].mxu0
        %v608 = vadd.f32 %v534, %v607
        %v609 = vpop.f32.mrb[0].mxu0
        %610 = vdwg.mxu0
        %611 = vmatprep.subr.mxu0 0.0
        %v612 = vand.u32 %v373, 4294901760
        %613 = vmatpush1.msra.mxu0 %v612
        %614 = vmatprep.subr.mxu0 0.0
        %615 = vmatpush1.msra.mxu0 0.0
        %616 = vmatprep.subr.mxu0 0.0
        %617 = vmatpush1.msra.mxu0 0.0
        %618 = vmatprep.subr.mxu0 0.0
        %619 = vmatpush1.msra.mxu0 0.0
        %620 = vmatprep.subr.mxu0 0.0
        %621 = vmatpush1.msra.mxu0 0.0
        %622 = vmatprep.subr.mxu0 0.0
        %623 = vmatpush1.msra.mxu0 0.0
        %624 = vmatprep.subr.mxu0 0.0
        %625 = vmatpush1.msra.mxu0 0.0
        %626 = vmatprep.subr.mxu0 0.0
        %627 = vmatpush1.msra.mxu0 0.0
        %628 = vmatprep.subr.mxu0 0.0
        %629 = vmatpush1.msra.mxu0 0.0
        %630 = vmatprep.subr.mxu0 0.0
        %631 = vmatpush1.msra.mxu0 0.0
        %632 = vmatprep.subr.mxu0 0.0
        %633 = vmatpush1.msra.mxu0 0.0
        %634 = vmatprep.subr.mxu0 0.0
        %635 = vmatpush1.msra.mxu0 0.0
        %636 = vmatprep.subr.mxu0 0.0
        %637 = vmatpush1.msra.mxu0 0.0
        %638 = vmatprep.subr.mxu0 0.0
        %639 = vmatpush1.msra.mxu0 0.0
        %640 = vmatprep.subr.mxu0 0.0
        %641 = vmatpush1.msra.mxu0 0.0
        %642 = vmatprep.subr.mxu0 0.0
        %643 = vmatpush1.msra.mxu0 0.0
        %644 = vmatprep.subr.mxu0 0.0
        %645 = vmatpush1.msra.mxu0 0.0
        %646 = vmatprep.subr.mxu0 0.0
        %647 = vmatpush1.msra.mxu0 0.0
        %648 = vmatprep.subr.mxu0 0.0
        %649 = vmatpush1.msra.mxu0 0.0
        %650 = vmatprep.subr.mxu0 0.0
        %651 = vmatpush1.msra.mxu0 0.0
        %652 = vmatprep.subr.mxu0 0.0
        %653 = vmatpush1.msra.mxu0 0.0
        %654 = vmatprep.subr.mxu0 0.0
        %655 = vmatpush1.msra.mxu0 0.0
        %656 = vmatprep.subr.mxu0 0.0
        %657 = vmatpush1.msra.mxu0 0.0
        %658 = vmatprep.subr.mxu0 0.0
        %659 = vmatpush1.msra.mxu0 0.0
        %660 = vmatprep.subr.mxu0 0.0
        %661 = vmatpush1.msra.mxu0 0.0
        %662 = vmatprep.subr.mxu0 0.0
        %663 = vmatpush1.msra.mxu0 0.0
        %664 = vmatprep.subr.mxu0 0.0
        %665 = vmatpush1.msra.mxu0 0.0
        %666 = vmatprep.subr.mxu0 0.0
        %667 = vmatpush1.msra.mxu0 0.0
        %668 = vmatprep.subr.mxu0 0.0
        %669 = vmatpush1.msra.mxu0 0.0
        %670 = vmatprep.subr.mxu0 0.0
        %671 = vmatpush1.msra.mxu0 0.0
        %672 = vmatprep.subr.mxu0 0.0
        %673 = vmatpush1.msra.mxu0 0.0
        %674 = vmatprep.subr.mxu0 0.0
        %675 = vmatpush1.msra.mxu0 0.0
        %676 = vmatprep.mubr.f32.mxu0 0.0
        %v677 = vand.u32 %v383, 4294901760
        %v678 = vsub.f32 %v383, %v677
        %v679 = vand.u32 %v678, 4294901760
        %680 = vmatmul.mubr.f32.gmra.mrb[0].mxu0 %v679
        %v681 = vpop.f32.mrb[0].mxu0
        %v682 = vadd.f32 %v608, %v681
        %v683 = vpop.f32.mrb[0].mxu0
        %684 = vdwg.mxu0
        %685 = vmatprep.subr.mxu0 0.0
        %v686 = vand.u32 %v373, 4294901760
        %v687 = vsub.f32 %v373, %v686
        %v688 = vand.u32 %v687, 4294901760
        %689 = vmatpush1.msra.mxu0 %v688
        %690 = vmatprep.subr.mxu0 0.0
        %691 = vmatpush1.msra.mxu0 0.0
        %692 = vmatprep.subr.mxu0 0.0
        %693 = vmatpush1.msra.mxu0 0.0
        %694 = vmatprep.subr.mxu0 0.0
        %695 = vmatpush1.msra.mxu0 0.0
        %696 = vmatprep.subr.mxu0 0.0
        %697 = vmatpush1.msra.mxu0 0.0
        %698 = vmatprep.subr.mxu0 0.0
        %699 = vmatpush1.msra.mxu0 0.0
        %700 = vmatprep.subr.mxu0 0.0
        %701 = vmatpush1.msra.mxu0 0.0
        %702 = vmatprep.subr.mxu0 0.0
        %703 = vmatpush1.msra.mxu0 0.0
        %704 = vmatprep.subr.mxu0 0.0
        %705 = vmatpush1.msra.mxu0 0.0
        %706 = vmatprep.subr.mxu0 0.0
        %707 = vmatpush1.msra.mxu0 0.0
        %708 = vmatprep.subr.mxu0 0.0
        %709 = vmatpush1.msra.mxu0 0.0
        %710 = vmatprep.subr.mxu0 0.0
        %711 = vmatpush1.msra.mxu0 0.0
        %712 = vmatprep.subr.mxu0 0.0
        %713 = vmatpush1.msra.mxu0 0.0
        %714 = vmatprep.subr.mxu0 0.0
        %715 = vmatpush1.msra.mxu0 0.0
        %716 = vmatprep.subr.mxu0 0.0
        %717 = vmatpush1.msra.mxu0 0.0
        %718 = vmatprep.subr.mxu0 0.0
        %719 = vmatpush1.msra.mxu0 0.0
        %720 = vmatprep.subr.mxu0 0.0
        %721 = vmatpush1.msra.mxu0 0.0
        %722 = vmatprep.subr.mxu0 0.0
        %723 = vmatpush1.msra.mxu0 0.0
        %724 = vmatprep.subr.mxu0 0.0
        %725 = vmatpush1.msra.mxu0 0.0
        %726 = vmatprep.subr.mxu0 0.0
        %727 = vmatpush1.msra.mxu0 0.0
        %728 = vmatprep.subr.mxu0 0.0
        %729 = vmatpush1.msra.mxu0 0.0
        %730 = vmatprep.subr.mxu0 0.0
        %731 = vmatpush1.msra.mxu0 0.0
        %732 = vmatprep.subr.mxu0 0.0
        %733 = vmatpush1.msra.mxu0 0.0
        %734 = vmatprep.subr.mxu0 0.0
        %735 = vmatpush1.msra.mxu0 0.0
        %736 = vmatprep.subr.mxu0 0.0
        %737 = vmatpush1.msra.mxu0 0.0
        %738 = vmatprep.subr.mxu0 0.0
        %739 = vmatpush1.msra.mxu0 0.0
        %740 = vmatprep.subr.mxu0 0.0
        %741 = vmatpush1.msra.mxu0 0.0
        %742 = vmatprep.subr.mxu0 0.0
        %743 = vmatpush1.msra.mxu0 0.0
        %744 = vmatprep.subr.mxu0 0.0
        %745 = vmatpush1.msra.mxu0 0.0
        %746 = vmatprep.subr.mxu0 0.0
        %747 = vmatpush1.msra.mxu0 0.0
        %748 = vmatprep.subr.mxu0 0.0
        %749 = vmatpush1.msra.mxu0 0.0
        %750 = vmatprep.subr.mxu0 0.0
        %751 = vmatpush1.msra.mxu0 0.0
        %752 = vmatprep.mubr.f32.mxu0 0.0
        %v753 = vand.u32 %v383, 4294901760
        %754 = vmatmul.mubr.f32.gmra.mrb[0].mxu0 %v753
        %v755 = vpop.f32.mrb[0].mxu0
        %v756 = vadd.f32 %v682, %v755
        %v757 = vpop.f32.mrb[0].mxu0
        %758 = vdwg.mxu0
        %759 = vmatprep.subr.mxu0 0.0
        %v760 = vand.u32 %v373, 4294901760
        %761 = vmatpush1.msra.mxu0 %v760
        %762 = vmatprep.subr.mxu0 0.0
        %763 = vmatpush1.msra.mxu0 0.0
        %764 = vmatprep.subr.mxu0 0.0
        %765 = vmatpush1.msra.mxu0 0.0
        %766 = vmatprep.subr.mxu0 0.0
        %767 = vmatpush1.msra.mxu0 0.0
        %768 = vmatprep.subr.mxu0 0.0
        %769 = vmatpush1.msra.mxu0 0.0
        %770 = vmatprep.subr.mxu0 0.0
        %771 = vmatpush1.msra.mxu0 0.0
        %772 = vmatprep.subr.mxu0 0.0
        %773 = vmatpush1.msra.mxu0 0.0
        %774 = vmatprep.subr.mxu0 0.0
        %775 = vmatpush1.msra.mxu0 0.0
        %776 = vmatprep.subr.mxu0 0.0
        %777 = vmatpush1.msra.mxu0 0.0
        %778 = vmatprep.subr.mxu0 0.0
        %779 = vmatpush1.msra.mxu0 0.0
        %780 = vmatprep.subr.mxu0 0.0
        %781 = vmatpush1.msra.mxu0 0.0
        %782 = vmatprep.subr.mxu0 0.0
        %783 = vmatpush1.msra.mxu0 0.0
        %784 = vmatprep.subr.mxu0 0.0
        %785 = vmatpush1.msra.mxu0 0.0
        %786 = vmatprep.subr.mxu0 0.0
        %787 = vmatpush1.msra.mxu0 0.0
        %788 = vmatprep.subr.mxu0 0.0
        %789 = vmatpush1.msra.mxu0 0.0
        %790 = vmatprep.subr.mxu0 0.0
        %791 = vmatpush1.msra.mxu0 0.0
        %792 = vmatprep.subr.mxu0 0.0
        %793 = vmatpush1.msra.mxu0 0.0
        %794 = vmatprep.subr.mxu0 0.0
        %795 = vmatpush1.msra.mxu0 0.0
        %796 = vmatprep.subr.mxu0 0.0
        %797 = vmatpush1.msra.mxu0 0.0
        %798 = vmatprep.subr.mxu0 0.0
        %799 = vmatpush1.msra.mxu0 0.0
        %800 = vmatprep.subr.mxu0 0.0
        %801 = vmatpush1.msra.mxu0 0.0
        %802 = vmatprep.subr.mxu0 0.0
        %803 = vmatpush1.msra.mxu0 0.0
        %804 = vmatprep.subr.mxu0 0.0
        %805 = vmatpush1.msra.mxu0 0.0
        %806 = vmatprep.subr.mxu0 0.0
        %807 = vmatpush1.msra.mxu0 0.0
        %808 = vmatprep.subr.mxu0 0.0
        %809 = vmatpush1.msra.mxu0 0.0
        %810 = vmatprep.subr.mxu0 0.0
        %811 = vmatpush1.msra.mxu0 0.0
        %812 = vmatprep.subr.mxu0 0.0
        %813 = vmatpush1.msra.mxu0 0.0
        %814 = vmatprep.subr.mxu0 0.0
        %815 = vmatpush1.msra.mxu0 0.0
        %816 = vmatprep.subr.mxu0 0.0
        %817 = vmatpush1.msra.mxu0 0.0
        %818 = vmatprep.subr.mxu0 0.0
        %819 = vmatpush1.msra.mxu0 0.0
        %820 = vmatprep.subr.mxu0 0.0
        %821 = vmatpush1.msra.mxu0 0.0
        %822 = vmatprep.subr.mxu0 0.0
        %823 = vmatpush1.msra.mxu0 0.0
        %824 = vmatprep.mubr.f32.mxu0 0.0
        %v825 = vand.u32 %v383, 4294901760
        %826 = vmatmul.mubr.f32.gmra.mrb[0].mxu0 %v825
        %v827 = vpop.f32.mrb[0].mxu0
        %v828 = vadd.f32 %v756, %v827
        %v829 = vpop.f32.mrb[0].mxu0
        %830 = vdwg.mxu0
        %v831 = vmax.f32 %v828, 0.0
        %v832 = vld [vmem:[%s3] sm:$0xff]
        %v833 = vld [vmem:[%s4] sm:$0xff]
        %835 = vset.pattern.permute.xlu0 0
        %836 = vperm.xlu0 %835, %v833
        %v837 = vpop.permute.xlu0 %836
        %vm839 = vcmask 31744
        %v841 = vsel %vm839, %v832, 0
        %vm843 = vcmask 1043456
        %v845 = vsel %vm843, %v831, 0
        %847 = vmatprep.subr.mxu0 0.0
        %v848 = vand.u32 %v845, 4294901760
        %849 = vmatpush1.msra.mxu0 %v848
        %850 = vmatprep.subr.mxu0 0.0
        %851 = vmatpush1.msra.mxu0 0.0
        %852 = vmatprep.subr.mxu0 0.0
        %853 = vmatpush1.msra.mxu0 0.0
        %854 = vmatprep.subr.mxu0 0.0
        %855 = vmatpush1.msra.mxu0 0.0
        %856 = vmatprep.subr.mxu0 0.0
        %857 = vmatpush1.msra.mxu0 0.0
        %858 = vmatprep.subr.mxu0 0.0
        %859 = vmatpush1.msra.mxu0 0.0
        %860 = vmatprep.subr.mxu0 0.0
        %861 = vmatpush1.msra.mxu0 0.0
        %862 = vmatprep.subr.mxu0 0.0
        %863 = vmatpush1.msra.mxu0 0.0
        %864 = vmatprep.subr.mxu0 0.0
        %865 = vmatpush1.msra.mxu0 0.0
        %866 = vmatprep.subr.mxu0 0.0
        %867 = vmatpush1.msra.mxu0 0.0
        %868 = vmatprep.subr.mxu0 0.0
        %869 = vmatpush1.msra.mxu0 0.0
        %870 = vmatprep.subr.mxu0 0.0
        %871 = vmatpush1.msra.mxu0 0.0
        %872 = vmatprep.subr.mxu0 0.0
        %873 = vmatpush1.msra.mxu0 0.0
        %874 = vmatprep.subr.mxu0 0.0
        %875 = vmatpush1.msra.mxu0 0.0
        %876 = vmatprep.subr.mxu0 0.0
        %877 = vmatpush1.msra.mxu0 0.0
        %878 = vmatprep.subr.mxu0 0.0
        %879 = vmatpush1.msra.mxu0 0.0
        %880 = vmatprep.subr.mxu0 0.0
        %881 = vmatpush1.msra.mxu0 0.0
        %882 = vmatprep.subr.mxu0 0.0
        %883 = vmatpush1.msra.mxu0 0.0
        %884 = vmatprep.subr.mxu0 0.0
        %885 = vmatpush1.msra.mxu0 0.0
        %886 = vmatprep.subr.mxu0 0.0
        %887 = vmatpush1.msra.mxu0 0.0
        %888 = vmatprep.subr.mxu0 0.0
        %889 = vmatpush1.msra.mxu0 0.0
        %890 = vmatprep.subr.mxu0 0.0
        %891 = vmatpush1.msra.mxu0 0.0
        %892 = vmatprep.subr.mxu0 0.0
        %893 = vmatpush1.msra.mxu0 0.0
        %894 = vmatprep.subr.mxu0 0.0
        %895 = vmatpush1.msra.mxu0 0.0
        %896 = vmatprep.subr.mxu0 0.0
        %897 = vmatpush1.msra.mxu0 0.0
        %898 = vmatprep.subr.mxu0 0.0
        %899 = vmatpush1.msra.mxu0 0.0
        %900 = vmatprep.subr.mxu0 0.0
        %901 = vmatpush1.msra.mxu0 0.0
        %902 = vmatprep.subr.mxu0 0.0
        %903 = vmatpush1.msra.mxu0 0.0
        %904 = vmatprep.subr.mxu0 0.0
        %905 = vmatpush1.msra.mxu0 0.0
        %906 = vmatprep.subr.mxu0 0.0
        %907 = vmatpush1.msra.mxu0 0.0
        %908 = vmatprep.subr.mxu0 0.0
        %909 = vmatpush1.msra.mxu0 0.0
        %910 = vmatprep.subr.mxu0 0.0
        %911 = vmatpush1.msra.mxu0 0.0
        %912 = vmatprep.mubr.f32.mxu0 0.0
        %v913 = vand.u32 %v841, 4294901760
        %v914 = vsub.f32 %v841, %v913
        %v915 = vand.u32 %v914, 4294901760
        %v916 = vsub.f32 %v914, %v915
        %v917 = vand.u32 %v916, 4294901760
        %918 = vmatmul.mubr.f32.gmra.mrb[0].mxu0 %v917
        %v919 = vpop.f32.mrb[0].mxu0
        %v920 = vadd.f32 %v837, %v919
        %v921 = vpop.f32.mrb[0].mxu0
        %922 = vdwg.mxu0
        %923 = vmatprep.subr.mxu0 0.0
        %v924 = vand.u32 %v845, 4294901760
        %v925 = vsub.f32 %v845, %v924
        %v926 = vand.u32 %v925, 4294901760
        %v927 = vsub.f32 %v925, %v926
        %v928 = vand.u32 %v927, 4294901760
        %929 = vmatpush1.msra.mxu0 %v928
        %930 = vmatprep.subr.mxu0 0.0
        %931 = vmatpush1.msra.mxu0 0.0
        %932 = vmatprep.subr.mxu0 0.0
        %933 = vmatpush1.msra.mxu0 0.0
        %934 = vmatprep.subr.mxu0 0.0
        %935 = vmatpush1.msra.mxu0 0.0
        %936 = vmatprep.subr.mxu0 0.0
        %937 = vmatpush1.msra.mxu0 0.0
        %938 = vmatprep.subr.mxu0 0.0
        %939 = vmatpush1.msra.mxu0 0.0
        %940 = vmatprep.subr.mxu0 0.0
        %941 = vmatpush1.msra.mxu0 0.0
        %942 = vmatprep.subr.mxu0 0.0
        %943 = vmatpush1.msra.mxu0 0.0
        %944 = vmatprep.subr.mxu0 0.0
        %945 = vmatpush1.msra.mxu0 0.0
        %946 = vmatprep.subr.mxu0 0.0
        %947 = vmatpush1.msra.mxu0 0.0
        %948 = vmatprep.subr.mxu0 0.0
        %949 = vmatpush1.msra.mxu0 0.0
        %950 = vmatprep.subr.mxu0 0.0
        %951 = vmatpush1.msra.mxu0 0.0
        %952 = vmatprep.subr.mxu0 0.0
        %953 = vmatpush1.msra.mxu0 0.0
        %954 = vmatprep.subr.mxu0 0.0
        %955 = vmatpush1.msra.mxu0 0.0
        %956 = vmatprep.subr.mxu0 0.0
        %957 = vmatpush1.msra.mxu0 0.0
        %958 = vmatprep.subr.mxu0 0.0
        %959 = vmatpush1.msra.mxu0 0.0
        %960 = vmatprep.subr.mxu0 0.0
        %961 = vmatpush1.msra.mxu0 0.0
        %962 = vmatprep.subr.mxu0 0.0
        %963 = vmatpush1.msra.mxu0 0.0
        %964 = vmatprep.subr.mxu0 0.0
        %965 = vmatpush1.msra.mxu0 0.0
        %966 = vmatprep.subr.mxu0 0.0
        %967 = vmatpush1.msra.mxu0 0.0
        %968 = vmatprep.subr.mxu0 0.0
        %969 = vmatpush1.msra.mxu0 0.0
        %970 = vmatprep.subr.mxu0 0.0
        %971 = vmatpush1.msra.mxu0 0.0
        %972 = vmatprep.subr.mxu0 0.0
        %973 = vmatpush1.msra.mxu0 0.0
        %974 = vmatprep.subr.mxu0 0.0
        %975 = vmatpush1.msra.mxu0 0.0
        %976 = vmatprep.subr.mxu0 0.0
        %977 = vmatpush1.msra.mxu0 0.0
        %978 = vmatprep.subr.mxu0 0.0
        %979 = vmatpush1.msra.mxu0 0.0
        %980 = vmatprep.subr.mxu0 0.0
        %981 = vmatpush1.msra.mxu0 0.0
        %982 = vmatprep.subr.mxu0 0.0
        %983 = vmatpush1.msra.mxu0 0.0
        %984 = vmatprep.subr.mxu0 0.0
        %985 = vmatpush1.msra.mxu0 0.0
        %986 = vmatprep.subr.mxu0 0.0
        %987 = vmatpush1.msra.mxu0 0.0
        %988 = vmatprep.subr.mxu0 0.0
        %989 = vmatpush1.msra.mxu0 0.0
        %990 = vmatprep.subr.mxu0 0.0
        %991 = vmatpush1.msra.mxu0 0.0
        %992 = vmatprep.mubr.f32.mxu0 0.0
        %v993 = vand.u32 %v841, 4294901760
        %994 = vmatmul.mubr.f32.gmra.mrb[0].mxu0 %v993
        %v995 = vpop.f32.mrb[0].mxu0
        %v996 = vadd.f32 %v920, %v995
        %v997 = vpop.f32.mrb[0].mxu0
        %998 = vdwg.mxu0
        %999 = vmatprep.subr.mxu0 0.0
        %v1000 = vand.u32 %v845, 4294901760
        %v1001 = vsub.f32 %v845, %v1000
        %1002 = vmatpush1.msra.mxu0 %v1001
        %1003 = vmatprep.subr.mxu0 0.0
        %1004 = vmatpush1.msra.mxu0 0.0
        %1005 = vmatprep.subr.mxu0 0.0
        %1006 = vmatpush1.msra.mxu0 0.0
        %1007 = vmatprep.subr.mxu0 0.0
        %1008 = vmatpush1.msra.mxu0 0.0
        %1009 = vmatprep.subr.mxu0 0.0
        %1010 = vmatpush1.msra.mxu0 0.0
        %1011 = vmatprep.subr.mxu0 0.0
        %1012 = vmatpush1.msra.mxu0 0.0
        %1013 = vmatprep.subr.mxu0 0.0
        %1014 = vmatpush1.msra.mxu0 0.0
        %1015 = vmatprep.subr.mxu0 0.0
        %1016 = vmatpush1.msra.mxu0 0.0
        %1017 = vmatprep.subr.mxu0 0.0
        %1018 = vmatpush1.msra.mxu0 0.0
        %1019 = vmatprep.subr.mxu0 0.0
        %1020 = vmatpush1.msra.mxu0 0.0
        %1021 = vmatprep.subr.mxu0 0.0
        %1022 = vmatpush1.msra.mxu0 0.0
        %1023 = vmatprep.subr.mxu0 0.0
        %1024 = vmatpush1.msra.mxu0 0.0
        %1025 = vmatprep.subr.mxu0 0.0
        %1026 = vmatpush1.msra.mxu0 0.0
        %1027 = vmatprep.subr.mxu0 0.0
        %1028 = vmatpush1.msra.mxu0 0.0
        %1029 = vmatprep.subr.mxu0 0.0
        %1030 = vmatpush1.msra.mxu0 0.0
        %1031 = vmatprep.subr.mxu0 0.0
        %1032 = vmatpush1.msra.mxu0 0.0
        %1033 = vmatprep.subr.mxu0 0.0
        %1034 = vmatpush1.msra.mxu0 0.0
        %1035 = vmatprep.subr.mxu0 0.0
        %1036 = vmatpush1.msra.mxu0 0.0
        %1037 = vmatprep.subr.mxu0 0.0
        %1038 = vmatpush1.msra.mxu0 0.0
        %1039 = vmatprep.subr.mxu0 0.0
        %1040 = vmatpush1.msra.mxu0 0.0
        %1041 = vmatprep.subr.mxu0 0.0
        %1042 = vmatpush1.msra.mxu0 0.0
        %1043 = vmatprep.subr.mxu0 0.0
        %1044 = vmatpush1.msra.mxu0 0.0
        %1045 = vmatprep.subr.mxu0 0.0
        %1046 = vmatpush1.msra.mxu0 0.0
        %1047 = vmatprep.subr.mxu0 0.0
        %1048 = vmatpush1.msra.mxu0 0.0
        %1049 = vmatprep.subr.mxu0 0.0
        %1050 = vmatpush1.msra.mxu0 0.0
        %1051 = vmatprep.subr.mxu0 0.0
        %1052 = vmatpush1.msra.mxu0 0.0
        %1053 = vmatprep.subr.mxu0 0.0
        %1054 = vmatpush1.msra.mxu0 0.0
        %1055 = vmatprep.subr.mxu0 0.0
        %1056 = vmatpush1.msra.mxu0 0.0
        %1057 = vmatprep.subr.mxu0 0.0
        %1058 = vmatpush1.msra.mxu0 0.0
        %1059 = vmatprep.subr.mxu0 0.0
        %1060 = vmatpush1.msra.mxu0 0.0
        %1061 = vmatprep.subr.mxu0 0.0
        %1062 = vmatpush1.msra.mxu0 0.0
        %1063 = vmatprep.subr.mxu0 0.0
        %1064 = vmatpush1.msra.mxu0 0.0
        %1065 = vmatprep.mubr.f32.mxu0 0.0
        %v1066 = vand.u32 %v841, 4294901760
        %v1067 = vsub.f32 %v841, %v1066
        %1068 = vmatmul.mubr.f32.gmra.mrb[0].mxu0 %v1067
        %v1069 = vpop.f32.mrb[0].mxu0
        %v1070 = vadd.f32 %v996, %v1069
        %v1071 = vpop.f32.mrb[0].mxu0
        %1072 = vdwg.mxu0
        %1073 = vmatprep.subr.mxu0 0.0
        %v1074 = vand.u32 %v845, 4294901760
        %1075 = vmatpush1.msra.mxu0 %v1074
        %1076 = vmatprep.subr.mxu0 0.0
        %1077 = vmatpush1.msra.mxu0 0.0
        %1078 = vmatprep.subr.mxu0 0.0
        %1079 = vmatpush1.msra.mxu0 0.0
        %1080 = vmatprep.subr.mxu0 0.0
        %1081 = vmatpush1.msra.mxu0 0.0
        %1082 = vmatprep.subr.mxu0 0.0
        %1083 = vmatpush1.msra.mxu0 0.0
        %1084 = vmatprep.subr.mxu0 0.0
        %1085 = vmatpush1.msra.mxu0 0.0
        %1086 = vmatprep.subr.mxu0 0.0
        %1087 = vmatpush1.msra.mxu0 0.0
        %1088 = vmatprep.subr.mxu0 0.0
        %1089 = vmatpush1.msra.mxu0 0.0
        %1090 = vmatprep.subr.mxu0 0.0
        %1091 = vmatpush1.msra.mxu0 0.0
        %1092 = vmatprep.subr.mxu0 0.0
        %1093 = vmatpush1.msra.mxu0 0.0
        %1094 = vmatprep.subr.mxu0 0.0
        %1095 = vmatpush1.msra.mxu0 0.0
        %1096 = vmatprep.subr.mxu0 0.0
        %1097 = vmatpush1.msra.mxu0 0.0
        %1098 = vmatprep.subr.mxu0 0.0
        %1099 = vmatpush1.msra.mxu0 0.0
        %1100 = vmatprep.subr.mxu0 0.0
        %1101 = vmatpush1.msra.mxu0 0.0
        %1102 = vmatprep.subr.mxu0 0.0
        %1103 = vmatpush1.msra.mxu0 0.0
        %1104 = vmatprep.subr.mxu0 0.0
        %1105 = vmatpush1.msra.mxu0 0.0
        %1106 = vmatprep.subr.mxu0 0.0
        %1107 = vmatpush1.msra.mxu0 0.0
        %1108 = vmatprep.subr.mxu0 0.0
        %1109 = vmatpush1.msra.mxu0 0.0
        %1110 = vmatprep.subr.mxu0 0.0
        %1111 = vmatpush1.msra.mxu0 0.0
        %1112 = vmatprep.subr.mxu0 0.0
        %1113 = vmatpush1.msra.mxu0 0.0
        %1114 = vmatprep.subr.mxu0 0.0
        %1115 = vmatpush1.msra.mxu0 0.0
        %1116 = vmatprep.subr.mxu0 0.0
        %1117 = vmatpush1.msra.mxu0 0.0
        %1118 = vmatprep.subr.mxu0 0.0
        %1119 = vmatpush1.msra.mxu0 0.0
        %1120 = vmatprep.subr.mxu0 0.0
        %1121 = vmatpush1.msra.mxu0 0.0
        %1122 = vmatprep.subr.mxu0 0.0
        %1123 = vmatpush1.msra.mxu0 0.0
        %1124 = vmatprep.subr.mxu0 0.0
        %1125 = vmatpush1.msra.mxu0 0.0
        %1126 = vmatprep.subr.mxu0 0.0
        %1127 = vmatpush1.msra.mxu0 0.0
        %1128 = vmatprep.subr.mxu0 0.0
        %1129 = vmatpush1.msra.mxu0 0.0
        %1130 = vmatprep.subr.mxu0 0.0
        %1131 = vmatpush1.msra.mxu0 0.0
        %1132 = vmatprep.subr.mxu0 0.0
        %1133 = vmatpush1.msra.mxu0 0.0
        %1134 = vmatprep.subr.mxu0 0.0
        %1135 = vmatpush1.msra.mxu0 0.0
        %1136 = vmatprep.subr.mxu0 0.0
        %1137 = vmatpush1.msra.mxu0 0.0
        %1138 = vmatprep.mubr.f32.mxu0 0.0
        %v1139 = vand.u32 %v841, 4294901760
        %v1140 = vsub.f32 %v841, %v1139
        %v1141 = vand.u32 %v1140, 4294901760
        %1142 = vmatmul.mubr.f32.gmra.mrb[0].mxu0 %v1141
        %v1143 = vpop.f32.mrb[0].mxu0
        %v1144 = vadd.f32 %v1070, %v1143
        %v1145 = vpop.f32.mrb[0].mxu0
        %1146 = vdwg.mxu0
        %1147 = vmatprep.subr.mxu0 0.0
        %v1148 = vand.u32 %v845, 4294901760
        %v1149 = vsub.f32 %v845, %v1148
        %v1150 = vand.u32 %v1149, 4294901760
        %1151 = vmatpush1.msra.mxu0 %v1150
        %1152 = vmatprep.subr.mxu0 0.0
        %1153 = vmatpush1.msra.mxu0 0.0
        %1154 = vmatprep.subr.mxu0 0.0
        %1155 = vmatpush1.msra.mxu0 0.0
        %1156 = vmatprep.subr.mxu0 0.0
        %1157 = vmatpush1.msra.mxu0 0.0
        %1158 = vmatprep.subr.mxu0 0.0
        %1159 = vmatpush1.msra.mxu0 0.0
        %1160 = vmatprep.subr.mxu0 0.0
        %1161 = vmatpush1.msra.mxu0 0.0
        %1162 = vmatprep.subr.mxu0 0.0
        %1163 = vmatpush1.msra.mxu0 0.0
        %1164 = vmatprep.subr.mxu0 0.0
        %1165 = vmatpush1.msra.mxu0 0.0
        %1166 = vmatprep.subr.mxu0 0.0
        %1167 = vmatpush1.msra.mxu0 0.0
        %1168 = vmatprep.subr.mxu0 0.0
        %1169 = vmatpush1.msra.mxu0 0.0
        %1170 = vmatprep.subr.mxu0 0.0
        %1171 = vmatpush1.msra.mxu0 0.0
        %1172 = vmatprep.subr.mxu0 0.0
        %1173 = vmatpush1.msra.mxu0 0.0
        %1174 = vmatprep.subr.mxu0 0.0
        %1175 = vmatpush1.msra.mxu0 0.0
        %1176 = vmatprep.subr.mxu0 0.0
        %1177 = vmatpush1.msra.mxu0 0.0
        %1178 = vmatprep.subr.mxu0 0.0
        %1179 = vmatpush1.msra.mxu0 0.0
        %1180 = vmatprep.subr.mxu0 0.0
        %1181 = vmatpush1.msra.mxu0 0.0
        %1182 = vmatprep.subr.mxu0 0.0
        %1183 = vmatpush1.msra.mxu0 0.0
        %1184 = vmatprep.subr.mxu0 0.0
        %1185 = vmatpush1.msra.mxu0 0.0
        %1186 = vmatprep.subr.mxu0 0.0
        %1187 = vmatpush1.msra.mxu0 0.0
        %1188 = vmatprep.subr.mxu0 0.0
        %1189 = vmatpush1.msra.mxu0 0.0
        %1190 = vmatprep.subr.mxu0 0.0
        %1191 = vmatpush1.msra.mxu0 0.0
        %1192 = vmatprep.subr.mxu0 0.0
        %1193 = vmatpush1.msra.mxu0 0.0
        %1194 = vmatprep.subr.mxu0 0.0
        %1195 = vmatpush1.msra.mxu0 0.0
        %1196 = vmatprep.subr.mxu0 0.0
        %1197 = vmatpush1.msra.mxu0 0.0
        %1198 = vmatprep.subr.mxu0 0.0
        %1199 = vmatpush1.msra.mxu0 0.0
        %1200 = vmatprep.subr.mxu0 0.0
        %1201 = vmatpush1.msra.mxu0 0.0
        %1202 = vmatprep.subr.mxu0 0.0
        %1203 = vmatpush1.msra.mxu0 0.0
        %1204 = vmatprep.subr.mxu0 0.0
        %1205 = vmatpush1.msra.mxu0 0.0
        %1206 = vmatprep.subr.mxu0 0.0
        %1207 = vmatpush1.msra.mxu0 0.0
        %1208 = vmatprep.subr.mxu0 0.0
        %1209 = vmatpush1.msra.mxu0 0.0
        %1210 = vmatprep.subr.mxu0 0.0
        %1211 = vmatpush1.msra.mxu0 0.0
        %1212 = vmatprep.subr.mxu0 0.0
        %1213 = vmatpush1.msra.mxu0 0.0
        %1214 = vmatprep.mubr.f32.mxu0 0.0
        %v1215 = vand.u32 %v841, 4294901760
        %1216 = vmatmul.mubr.f32.gmra.mrb[0].mxu0 %v1215
        %v1217 = vpop.f32.mrb[0].mxu0
        %v1218 = vadd.f32 %v1144, %v1217
        %v1219 = vpop.f32.mrb[0].mxu0
        %1220 = vdwg.mxu0
        %1221 = vmatprep.subr.mxu0 0.0
        %v1222 = vand.u32 %v845, 4294901760
        %1223 = vmatpush1.msra.mxu0 %v1222
        %1224 = vmatprep.subr.mxu0 0.0
        %1225 = vmatpush1.msra.mxu0 0.0
        %1226 = vmatprep.subr.mxu0 0.0
        %1227 = vmatpush1.msra.mxu0 0.0
        %1228 = vmatprep.subr.mxu0 0.0
        %1229 = vmatpush1.msra.mxu0 0.0
        %1230 = vmatprep.subr.mxu0 0.0
        %1231 = vmatpush1.msra.mxu0 0.0
        %1232 = vmatprep.subr.mxu0 0.0
        %1233 = vmatpush1.msra.mxu0 0.0
        %1234 = vmatprep.subr.mxu0 0.0
        %1235 = vmatpush1.msra.mxu0 0.0
        %1236 = vmatprep.subr.mxu0 0.0
        %1237 = vmatpush1.msra.mxu0 0.0
        %1238 = vmatprep.subr.mxu0 0.0
        %1239 = vmatpush1.msra.mxu0 0.0
        %1240 = vmatprep.subr.mxu0 0.0
        %1241 = vmatpush1.msra.mxu0 0.0
        %1242 = vmatprep.subr.mxu0 0.0
        %1243 = vmatpush1.msra.mxu0 0.0
        %1244 = vmatprep.subr.mxu0 0.0
        %1245 = vmatpush1.msra.mxu0 0.0
        %1246 = vmatprep.subr.mxu0 0.0
        %1247 = vmatpush1.msra.mxu0 0.0
        %1248 = vmatprep.subr.mxu0 0.0
        %1249 = vmatpush1.msra.mxu0 0.0
        %1250 = vmatprep.subr.mxu0 0.0
        %1251 = vmatpush1.msra.mxu0 0.0
        %1252 = vmatprep.subr.mxu0 0.0
        %1253 = vmatpush1.msra.mxu0 0.0
        %1254 = vmatprep.subr.mxu0 0.0
        %1255 = vmatpush1.msra.mxu0 0.0
        %1256 = vmatprep.subr.mxu0 0.0
        %1257 = vmatpush1.msra.mxu0 0.0
        %1258 = vmatprep.subr.mxu0 0.0
        %1259 = vmatpush1.msra.mxu0 0.0
        %1260 = vmatprep.subr.mxu0 0.0
        %1261 = vmatpush1.msra.mxu0 0.0
        %1262 = vmatprep.subr.mxu0 0.0
        %1263 = vmatpush1.msra.mxu0 0.0
        %1264 = vmatprep.subr.mxu0 0.0
        %1265 = vmatpush1.msra.mxu0 0.0
        %1266 = vmatprep.subr.mxu0 0.0
        %1267 = vmatpush1.msra.mxu0 0.0
        %1268 = vmatprep.subr.mxu0 0.0
        %1269 = vmatpush1.msra.mxu0 0.0
        %1270 = vmatprep.subr.mxu0 0.0
        %1271 = vmatpush1.msra.mxu0 0.0
        %1272 = vmatprep.subr.mxu0 0.0
        %1273 = vmatpush1.msra.mxu0 0.0
        %1274 = vmatprep.subr.mxu0 0.0
        %1275 = vmatpush1.msra.mxu0 0.0
        %1276 = vmatprep.subr.mxu0 0.0
        %1277 = vmatpush1.msra.mxu0 0.0
        %1278 = vmatprep.subr.mxu0 0.0
        %1279 = vmatpush1.msra.mxu0 0.0
        %1280 = vmatprep.subr.mxu0 0.0
        %1281 = vmatpush1.msra.mxu0 0.0
        %1282 = vmatprep.subr.mxu0 0.0
        %1283 = vmatpush1.msra.mxu0 0.0
        %1284 = vmatprep.subr.mxu0 0.0
        %1285 = vmatpush1.msra.mxu0 0.0
        %1286 = vmatprep.mubr.f32.mxu0 0.0
        %v1287 = vand.u32 %v841, 4294901760
        %1288 = vmatmul.mubr.f32.gmra.mrb[0].mxu0 %v1287
        %v1289 = vpop.f32.mrb[0].mxu0
        %v1290 = vadd.f32 %v1218, %v1289
        %v1291 = vpop.f32.mrb[0].mxu0
        %1292 = vdwg.mxu0
        %1294 = vrot.lane.b32.xlu0 %v1290, 127
        %v1295 = vpop.permute.xlu0 %1294
        %v1297 = vadd.f32 %v1290, %v1295
        %v1298 = vxor.u32 %v1297, 2147483648
        %v1299 = vmul.f32 %v1298, 1.442695
        %v1300 = vpow.pop %v1299
        %v1301 = vadd.f32 %v1300, 1.0
        %v1302 = vrcp.pop %v1301
        %v1303 = vmul.f32 1.0, %v1302
        %v1304 = vld [vmem:[%s7] sm:$0x7f]
        %v1305 = vld [vmem:[%s5] sm:$0x7f]
        %v1306 = vld [vmem:[%s5 + $0x8] sm:$0x7f]
        %v1307 = vld [vmem:[%s6] sm:$0x7f]
        %v1308 = vld [vmem:[%s6 + $0x8] sm:$0x7f]
        %s1309 = sld [smem:[#allocation2]]
        %1311 = vset.pattern.permute.xlu0 0
        %1312 = vperm.xlu0 %1311, %v1303
        %v1313 = vpop.permute.xlu0 %1312
        %v1315 = vmul.f32 %v363, %v1313
        %v1316 = vmul.f32 %v364, %v1313
        %v1317 = vrot.slane %v1315, 4
        %v1318 = vmax.f32 %v1315, %v1317
        %v1319 = vrot.slane %v1318, 2
        %v1320 = vmax.f32 %v1318, %v1319
        %v1321 = vrot.slane %v1320, 1
        %v1322 = vmax.f32 %v1320, %v1321
        %v1323 = vrot.slane %v1316, 4
        %v1324 = vmax.f32 %v1316, %v1323
        %v1325 = vrot.slane %v1324, 2
        %v1326 = vmax.f32 %v1324, %v1325
        %v1327 = vrot.slane %v1326, 1
        %v1328 = vmax.f32 %v1326, %v1327
        %v1329 = vrot.slane %v1315, 4
        %v1330 = vadd.f32 %v1315, %v1329
        %v1331 = vrot.slane %v1330, 2
        %v1332 = vadd.f32 %v1330, %v1331
        %v1333 = vrot.slane %v1332, 1
        %v1334 = vadd.f32 %v1332, %v1333
        %v1335 = vrot.slane %v1316, 4
        %v1336 = vadd.f32 %v1316, %v1335
        %v1337 = vrot.slane %v1336, 2
        %v1338 = vadd.f32 %v1336, %v1337
        %v1339 = vrot.slane %v1338, 1
        %v1340 = vadd.f32 %v1338, %v1339
        %v1341 = vmul.f32 %v1334, 0.125
        %v1342 = vmul.f32 %v1340, 0.125
        %vm1343 = vcmask 1040384
        %v1344 = vsel %vm1343, %v1322, %v1341
        %v1345 = vsel %vm1343, %v1328, %v1342
        %1346 = vrot.lane.b32.xlu0 %v1344, 48
        %v1347 = vpop.permute.xlu0 %1346
        %1348 = vrot.lane.b32.xlu0 %v1345, 48
        %v1349 = vpop.permute.xlu0 %1348
        %v1350 = vlaneseq
        %v1351 = vand.u32 %v1350, 127
        %vm1352 = vcmp.lt.s32.totalorder %v1351, 48
        %v1353 = vsel %vm1352, %v1347, %v1349
        %v1354 = vsel %vm1352, %v1349, %v1347
        %v1355 = vlaneseq
        %v1356 = vshrl.u32 %v1355, 7
        %v1357 = vsub.s32 0, %v1356
        %v1358 = vrot.slane %v1305, %v1357
        %v1359 = vlaneseq
        %v1360 = vshrl.u32 %v1359, 7
        %v1361 = vsub.s32 0, %v1360
        %v1362 = vrot.slane %v1306, %v1361
        %v1363 = vmul.f32 %v1354, %v1358
        %v1364 = vmul.f32 %v1353, %v1362
        %1365 = vrot.lane.b32.xlu0 %v1344, 32
        %v1366 = vpop.permute.xlu0 %1365
        %1367 = vrot.lane.b32.xlu0 %v1345, 32
        %v1368 = vpop.permute.xlu0 %1367
        %vm1369 = vcmp.lt.s32.totalorder %v1351, 32
        %v1370 = vsel %vm1369, %v1366, %v1368
        %v1371 = vsel %vm1369, %v1368, %v1366
        %v1372 = vlaneseq
        %v1373 = vshrl.u32 %v1372, 7
        %v1374 = vsub.s32 1, %v1373
        %v1375 = vrot.slane %v1305, %v1374
        %v1376 = vlaneseq
        %v1377 = vshrl.u32 %v1376, 7
        %v1378 = vsub.s32 1, %v1377
        %v1379 = vrot.slane %v1306, %v1378
        %v1380 = vmul.f32 %v1371, %v1375
        %v1381 = vmul.f32 %v1370, %v1379
        %1382 = vrot.lane.b32.xlu0 %v1344, 16
        %v1383 = vpop.permute.xlu0 %1382
        %1384 = vrot.lane.b32.xlu0 %v1345, 16
        %v1385 = vpop.permute.xlu0 %1384
        %vm1386 = vcmp.lt.s32.totalorder %v1351, 16
        %v1387 = vsel %vm1386, %v1383, %v1385
        %v1388 = vsel %vm1386, %v1385, %v1383
        %v1389 = vlaneseq
        %v1390 = vshrl.u32 %v1389, 7
        %v1391 = vsub.s32 2, %v1390
        %v1392 = vrot.slane %v1305, %v1391
        %v1393 = vlaneseq
        %v1394 = vshrl.u32 %v1393, 7
        %v1395 = vsub.s32 2, %v1394
        %v1396 = vrot.slane %v1306, %v1395
        %v1397 = vmul.f32 %v1388, %v1392
        %v1398 = vmul.f32 %v1387, %v1396
        %1399 = vrot.lane.b32.xlu0 %v1344, 112
        %v1400 = vpop.permute.xlu0 %1399
        %1401 = vrot.lane.b32.xlu0 %v1345, 112
        %v1402 = vpop.permute.xlu0 %1401
        %vm1403 = vcmp.lt.s32.totalorder %v1351, 112
        %v1404 = vsel %vm1403, %v1400, %v1402
        %v1405 = vsel %vm1403, %v1402, %v1400
        %v1406 = vlaneseq
        %v1407 = vshrl.u32 %v1406, 7
        %v1408 = vsub.s32 4, %v1407
        %v1409 = vrot.slane %v1305, %v1408
        %v1410 = vlaneseq
        %v1411 = vshrl.u32 %v1410, 7
        %v1412 = vsub.s32 4, %v1411
        %v1413 = vrot.slane %v1306, %v1412
        %v1414 = vmul.f32 %v1404, %v1409
        %v1415 = vmul.f32 %v1405, %v1413
        %1416 = vrot.lane.b32.xlu0 %v1344, 96
        %v1417 = vpop.permute.xlu0 %1416
        %1418 = vrot.lane.b32.xlu0 %v1345, 96
        %v1419 = vpop.permute.xlu0 %1418
        %vm1420 = vcmp.lt.s32.totalorder %v1351, 96
        %v1421 = vsel %vm1420, %v1417, %v1419
        %v1422 = vsel %vm1420, %v1419, %v1417
        %v1423 = vlaneseq
        %v1424 = vshrl.u32 %v1423, 7
        %v1425 = vsub.s32 5, %v1424
        %v1426 = vrot.slane %v1305, %v1425
        %v1427 = vlaneseq
        %v1428 = vshrl.u32 %v1427, 7
        %v1429 = vsub.s32 5, %v1428
        %v1430 = vrot.slane %v1306, %v1429
        %v1431 = vmul.f32 %v1421, %v1426
        %v1432 = vmul.f32 %v1422, %v1430
        %1433 = vrot.lane.b32.xlu0 %v1344, 80
        %v1434 = vpop.permute.xlu0 %1433
        %1435 = vrot.lane.b32.xlu0 %v1345, 80
        %v1436 = vpop.permute.xlu0 %1435
        %vm1437 = vcmp.lt.s32.totalorder %v1351, 80
        %v1438 = vsel %vm1437, %v1434, %v1436
        %v1439 = vsel %vm1437, %v1436, %v1434
        %v1440 = vlaneseq
        %v1441 = vshrl.u32 %v1440, 7
        %v1442 = vsub.s32 6, %v1441
        %v1443 = vrot.slane %v1305, %v1442
        %v1444 = vlaneseq
        %v1445 = vshrl.u32 %v1444, 7
        %v1446 = vsub.s32 6, %v1445
        %v1447 = vrot.slane %v1306, %v1446
        %v1448 = vmul.f32 %v1438, %v1443
        %v1449 = vmul.f32 %v1439, %v1447
        %v1452 = vrot.slane %v1380, 6
        %v1453 = vrot.slane %v1381, 6
        %v1458 = vrot.slane %v1397, 4
        %v1459 = vrot.slane %v1398, 4
        %v1464 = vrot.slane %v1344, 2
        %v1465 = vrot.slane %v1345, 2
        %v1470 = vrot.slane %v1431, 6
        %v1471 = vrot.slane %v1432, 6
        %v1476 = vrot.slane %v1448, 4
        %v1477 = vrot.slane %v1449, 4
        %vm1480 = vcmask 1041408
        %v1481 = vsel %vm1480, %v1363, %v1452
        %v1482 = vsel %vm1480, %v1364, %v1453
        %v1483 = vsel %vm843, %v1481, %v1458
        %v1484 = vsel %vm843, %v1482, %v1459
        %vm1485 = vcmask 1045504
        %v1486 = vsel %vm1485, %v1483, %v1464
        %v1487 = vsel %vm1485, %v1484, %v1465
        %v1488 = vsel %vm1480, %v1414, %v1470
        %v1489 = vsel %vm1480, %v1415, %v1471
        %v1490 = vsel %vm843, %v1488, %v1476
        %v1491 = vsel %vm843, %v1489, %v1477
        %v1492 = vsel %vm1485, %v1490, 0.0
        %v1493 = vsel %vm1485, %v1491, 0.0
        %vm1494 = vcmask 130048
        %v1496 = vsel %vm1494, %v1304, 0
        %v1498 = vand.u32 %v1487, 4294901760
        %1499 = vmatprep.subr.mxu0 %v1498
        %v1500 = vand.u32 %v1486, 4294901760
        %1501 = vmatpush1.msra.mxu0 %v1500
        %v1502 = vand.u32 %v1493, 4294901760
        %1503 = vmatprep.subr.mxu0 %v1502
        %v1504 = vand.u32 %v1492, 4294901760
        %1505 = vmatpush1.msra.mxu0 %v1504
        %1506 = vmatprep.subr.mxu0 0.0
        %1507 = vmatpush1.msra.mxu0 0.0
        %1508 = vmatprep.subr.mxu0 0.0
        %1509 = vmatpush1.msra.mxu0 0.0
        %1510 = vmatprep.subr.mxu0 0.0
        %1511 = vmatpush1.msra.mxu0 0.0
        %1512 = vmatprep.subr.mxu0 0.0
        %1513 = vmatpush1.msra.mxu0 0.0
        %1514 = vmatprep.subr.mxu0 0.0
        %1515 = vmatpush1.msra.mxu0 0.0
        %1516 = vmatprep.subr.mxu0 0.0
        %1517 = vmatpush1.msra.mxu0 0.0
        %1518 = vmatprep.subr.mxu0 0.0
        %1519 = vmatpush1.msra.mxu0 0.0
        %1520 = vmatprep.subr.mxu0 0.0
        %1521 = vmatpush1.msra.mxu0 0.0
        %1522 = vmatprep.subr.mxu0 0.0
        %1523 = vmatpush1.msra.mxu0 0.0
        %1524 = vmatprep.subr.mxu0 0.0
        %1525 = vmatpush1.msra.mxu0 0.0
        %1526 = vmatprep.subr.mxu0 0.0
        %1527 = vmatpush1.msra.mxu0 0.0
        %1528 = vmatprep.subr.mxu0 0.0
        %1529 = vmatpush1.msra.mxu0 0.0
        %1530 = vmatprep.subr.mxu0 0.0
        %1531 = vmatpush1.msra.mxu0 0.0
        %1532 = vmatprep.subr.mxu0 0.0
        %1533 = vmatpush1.msra.mxu0 0.0
        %1534 = vmatprep.subr.mxu0 0.0
        %1535 = vmatpush1.msra.mxu0 0.0
        %1536 = vmatprep.subr.mxu0 0.0
        %1537 = vmatpush1.msra.mxu0 0.0
        %1538 = vmatprep.subr.mxu0 0.0
        %1539 = vmatpush1.msra.mxu0 0.0
        %1540 = vmatprep.subr.mxu0 0.0
        %1541 = vmatpush1.msra.mxu0 0.0
        %1542 = vmatprep.subr.mxu0 0.0
        %1543 = vmatpush1.msra.mxu0 0.0
        %1544 = vmatprep.subr.mxu0 0.0
        %1545 = vmatpush1.msra.mxu0 0.0
        %1546 = vmatprep.subr.mxu0 0.0
        %1547 = vmatpush1.msra.mxu0 0.0
        %1548 = vmatprep.subr.mxu0 0.0
        %1549 = vmatpush1.msra.mxu0 0.0
        %1550 = vmatprep.subr.mxu0 0.0
        %1551 = vmatpush1.msra.mxu0 0.0
        %1552 = vmatprep.subr.mxu0 0.0
        %1553 = vmatpush1.msra.mxu0 0.0
        %1554 = vmatprep.subr.mxu0 0.0
        %1555 = vmatpush1.msra.mxu0 0.0
        %1556 = vmatprep.subr.mxu0 0.0
        %1557 = vmatpush1.msra.mxu0 0.0
        %1558 = vmatprep.subr.mxu0 0.0
        %1559 = vmatpush1.msra.mxu0 0.0
        %1560 = vmatprep.subr.mxu0 0.0
        %1561 = vmatpush1.msra.mxu0 0.0
        %1562 = vmatprep.subr.mxu0 0.0
        %1563 = vmatpush1.msra.mxu0 0.0
        %1564 = vmatprep.subr.mxu0 0.0
        %1565 = vmatpush1.msra.mxu0 0.0
        %1566 = vmatprep.mubr.f32.mxu0 0.0
        %v1567 = vand.u32 %v1496, 4294901760
        %v1568 = vsub.f32 %v1496, %v1567
        %v1569 = vand.u32 %v1568, 4294901760
        %v1570 = vsub.f32 %v1568, %v1569
        %v1571 = vand.u32 %v1570, 4294901760
        %1572 = vmatmul.mubr.f32.gmra.mrb[0].mxu0 %v1571
        %v1573 = vpop.f32.mrb[0].mxu0
        %v1574 = vadd.f32 0.0, %v1573
        %v1575 = vpop.f32.mrb[0].mxu0
        %v1576 = vadd.f32 0.0, %v1575
        %1577 = vdwg.mxu0
        %v1578 = vand.u32 %v1487, 4294901760
        %v1579 = vsub.f32 %v1487, %v1578
        %v1580 = vand.u32 %v1579, 4294901760
        %v1581 = vsub.f32 %v1579, %v1580
        %v1582 = vand.u32 %v1581, 4294901760
        %1583 = vmatprep.subr.mxu0 %v1582
        %v1584 = vand.u32 %v1486, 4294901760
        %v1585 = vsub.f32 %v1486, %v1584
        %v1586 = vand.u32 %v1585, 4294901760
        %v1587 = vsub.f32 %v1585, %v1586
        %v1588 = vand.u32 %v1587, 4294901760
        %1589 = vmatpush1.msra.mxu0 %v1588
        %v1590 = vand.u32 %v1493, 4294901760
        %v1591 = vsub.f32 %v1493, %v1590
        %v1592 = vand.u32 %v1591, 4294901760
        %v1593 = vsub.f32 %v1591, %v1592
        %v1594 = vand.u32 %v1593, 4294901760
        %1595 = vmatprep.subr.mxu0 %v1594
        %v1596 = vand.u32 %v1492, 4294901760
        %v1597 = vsub.f32 %v1492, %v1596
        %v1598 = vand.u32 %v1597, 4294901760
        %v1599 = vsub.f32 %v1597, %v1598
        %v1600 = vand.u32 %v1599, 4294901760
        %1601 = vmatpush1.msra.mxu0 %v1600
        %1602 = vmatprep.subr.mxu0 0.0
        %1603 = vmatpush1.msra.mxu0 0.0
        %1604 = vmatprep.subr.mxu0 0.0
        %1605 = vmatpush1.msra.mxu0 0.0
        %1606 = vmatprep.subr.mxu0 0.0
        %1607 = vmatpush1.msra.mxu0 0.0
        %1608 = vmatprep.subr.mxu0 0.0
        %1609 = vmatpush1.msra.mxu0 0.0
        %1610 = vmatprep.subr.mxu0 0.0
        %1611 = vmatpush1.msra.mxu0 0.0
        %1612 = vmatprep.subr.mxu0 0.0
        %1613 = vmatpush1.msra.mxu0 0.0
        %1614 = vmatprep.subr.mxu0 0.0
        %1615 = vmatpush1.msra.mxu0 0.0
        %1616 = vmatprep.subr.mxu0 0.0
        %1617 = vmatpush1.msra.mxu0 0.0
        %1618 = vmatprep.subr.mxu0 0.0
        %1619 = vmatpush1.msra.mxu0 0.0
        %1620 = vmatprep.subr.mxu0 0.0
        %1621 = vmatpush1.msra.mxu0 0.0
        %1622 = vmatprep.subr.mxu0 0.0
        %1623 = vmatpush1.msra.mxu0 0.0
        %1624 = vmatprep.subr.mxu0 0.0
        %1625 = vmatpush1.msra.mxu0 0.0
        %1626 = vmatprep.subr.mxu0 0.0
        %1627 = vmatpush1.msra.mxu0 0.0
        %1628 = vmatprep.subr.mxu0 0.0
        %1629 = vmatpush1.msra.mxu0 0.0
        %1630 = vmatprep.subr.mxu0 0.0
        %1631 = vmatpush1.msra.mxu0 0.0
        %1632 = vmatprep.subr.mxu0 0.0
        %1633 = vmatpush1.msra.mxu0 0.0
        %1634 = vmatprep.subr.mxu0 0.0
        %1635 = vmatpush1.msra.mxu0 0.0
        %1636 = vmatprep.subr.mxu0 0.0
        %1637 = vmatpush1.msra.mxu0 0.0
        %1638 = vmatprep.subr.mxu0 0.0
        %1639 = vmatpush1.msra.mxu0 0.0
        %1640 = vmatprep.subr.mxu0 0.0
        %1641 = vmatpush1.msra.mxu0 0.0
        %1642 = vmatprep.subr.mxu0 0.0
        %1643 = vmatpush1.msra.mxu0 0.0
        %1644 = vmatprep.subr.mxu0 0.0
        %1645 = vmatpush1.msra.mxu0 0.0
        %1646 = vmatprep.subr.mxu0 0.0
        %1647 = vmatpush1.msra.mxu0 0.0
        %1648 = vmatprep.subr.mxu0 0.0
        %1649 = vmatpush1.msra.mxu0 0.0
        %1650 = vmatprep.subr.mxu0 0.0
        %1651 = vmatpush1.msra.mxu0 0.0
        %1652 = vmatprep.subr.mxu0 0.0
        %1653 = vmatpush1.msra.mxu0 0.0
        %1654 = vmatprep.subr.mxu0 0.0
        %1655 = vmatpush1.msra.mxu0 0.0
        %1656 = vmatprep.subr.mxu0 0.0
        %1657 = vmatpush1.msra.mxu0 0.0
        %1658 = vmatprep.subr.mxu0 0.0
        %1659 = vmatpush1.msra.mxu0 0.0
        %1660 = vmatprep.subr.mxu0 0.0
        %1661 = vmatpush1.msra.mxu0 0.0
        %1662 = vmatprep.mubr.f32.mxu0 0.0
        %v1663 = vand.u32 %v1496, 4294901760
        %1664 = vmatmul.mubr.f32.gmra.mrb[0].mxu0 %v1663
        %v1665 = vpop.f32.mrb[0].mxu0
        %v1666 = vadd.f32 %v1574, %v1665
        %v1667 = vpop.f32.mrb[0].mxu0
        %v1668 = vadd.f32 %v1576, %v1667
        %1669 = vdwg.mxu0
        %v1670 = vand.u32 %v1487, 4294901760
        %v1671 = vsub.f32 %v1487, %v1670
        %1672 = vmatprep.subr.mxu0 %v1671
        %v1673 = vand.u32 %v1486, 4294901760
        %v1674 = vsub.f32 %v1486, %v1673
        %1675 = vmatpush1.msra.mxu0 %v1674
        %v1676 = vand.u32 %v1493, 4294901760
        %v1677 = vsub.f32 %v1493, %v1676
        %1678 = vmatprep.subr.mxu0 %v1677
        %v1679 = vand.u32 %v1492, 4294901760
        %v1680 = vsub.f32 %v1492, %v1679
        %1681 = vmatpush1.msra.mxu0 %v1680
        %1682 = vmatprep.subr.mxu0 0.0
        %1683 = vmatpush1.msra.mxu0 0.0
        %1684 = vmatprep.subr.mxu0 0.0
        %1685 = vmatpush1.msra.mxu0 0.0
        %1686 = vmatprep.subr.mxu0 0.0
        %1687 = vmatpush1.msra.mxu0 0.0
        %1688 = vmatprep.subr.mxu0 0.0
        %1689 = vmatpush1.msra.mxu0 0.0
        %1690 = vmatprep.subr.mxu0 0.0
        %1691 = vmatpush1.msra.mxu0 0.0
        %1692 = vmatprep.subr.mxu0 0.0
        %1693 = vmatpush1.msra.mxu0 0.0
        %1694 = vmatprep.subr.mxu0 0.0
        %1695 = vmatpush1.msra.mxu0 0.0
        %1696 = vmatprep.subr.mxu0 0.0
        %1697 = vmatpush1.msra.mxu0 0.0
        %1698 = vmatprep.subr.mxu0 0.0
        %1699 = vmatpush1.msra.mxu0 0.0
        %1700 = vmatprep.subr.mxu0 0.0
        %1701 = vmatpush1.msra.mxu0 0.0
        %1702 = vmatprep.subr.mxu0 0.0
        %1703 = vmatpush1.msra.mxu0 0.0
        %1704 = vmatprep.subr.mxu0 0.0
        %1705 = vmatpush1.msra.mxu0 0.0
        %1706 = vmatprep.subr.mxu0 0.0
        %1707 = vmatpush1.msra.mxu0 0.0
        %1708 = vmatprep.subr.mxu0 0.0
        %1709 = vmatpush1.msra.mxu0 0.0
        %1710 = vmatprep.subr.mxu0 0.0
        %1711 = vmatpush1.msra.mxu0 0.0
        %1712 = vmatprep.subr.mxu0 0.0
        %1713 = vmatpush1.msra.mxu0 0.0
        %1714 = vmatprep.subr.mxu0 0.0
        %1715 = vmatpush1.msra.mxu0 0.0
        %1716 = vmatprep.subr.mxu0 0.0
        %1717 = vmatpush1.msra.mxu0 0.0
        %1718 = vmatprep.subr.mxu0 0.0
        %1719 = vmatpush1.msra.mxu0 0.0
        %1720 = vmatprep.subr.mxu0 0.0
        %1721 = vmatpush1.msra.mxu0 0.0
        %1722 = vmatprep.subr.mxu0 0.0
        %1723 = vmatpush1.msra.mxu0 0.0
        %1724 = vmatprep.subr.mxu0 0.0
        %1725 = vmatpush1.msra.mxu0 0.0
        %1726 = vmatprep.subr.mxu0 0.0
        %1727 = vmatpush1.msra.mxu0 0.0
        %1728 = vmatprep.subr.mxu0 0.0
        %1729 = vmatpush1.msra.mxu0 0.0
        %1730 = vmatprep.subr.mxu0 0.0
        %1731 = vmatpush1.msra.mxu0 0.0
        %1732 = vmatprep.subr.mxu0 0.0
        %1733 = vmatpush1.msra.mxu0 0.0
        %1734 = vmatprep.subr.mxu0 0.0
        %1735 = vmatpush1.msra.mxu0 0.0
        %1736 = vmatprep.subr.mxu0 0.0
        %1737 = vmatpush1.msra.mxu0 0.0
        %1738 = vmatprep.subr.mxu0 0.0
        %1739 = vmatpush1.msra.mxu0 0.0
        %1740 = vmatprep.subr.mxu0 0.0
        %1741 = vmatpush1.msra.mxu0 0.0
        %1742 = vmatprep.mubr.f32.mxu0 0.0
        %v1743 = vand.u32 %v1496, 4294901760
        %v1744 = vsub.f32 %v1496, %v1743
        %1745 = vmatmul.mubr.f32.gmra.mrb[0].mxu0 %v1744
        %v1746 = vpop.f32.mrb[0].mxu0
        %v1747 = vadd.f32 %v1666, %v1746
        %v1748 = vpop.f32.mrb[0].mxu0
        %v1749 = vadd.f32 %v1668, %v1748
        %1750 = vdwg.mxu0
        %v1751 = vand.u32 %v1487, 4294901760
        %1752 = vmatprep.subr.mxu0 %v1751
        %v1753 = vand.u32 %v1486, 4294901760
        %1754 = vmatpush1.msra.mxu0 %v1753
        %v1755 = vand.u32 %v1493, 4294901760
        %1756 = vmatprep.subr.mxu0 %v1755
        %v1757 = vand.u32 %v1492, 4294901760
        %1758 = vmatpush1.msra.mxu0 %v1757
        %1759 = vmatprep.subr.mxu0 0.0
        %1760 = vmatpush1.msra.mxu0 0.0
        %1761 = vmatprep.subr.mxu0 0.0
        %1762 = vmatpush1.msra.mxu0 0.0
        %1763 = vmatprep.subr.mxu0 0.0
        %1764 = vmatpush1.msra.mxu0 0.0
        %1765 = vmatprep.subr.mxu0 0.0
        %1766 = vmatpush1.msra.mxu0 0.0
        %1767 = vmatprep.subr.mxu0 0.0
        %1768 = vmatpush1.msra.mxu0 0.0
        %1769 = vmatprep.subr.mxu0 0.0
        %1770 = vmatpush1.msra.mxu0 0.0
        %1771 = vmatprep.subr.mxu0 0.0
        %1772 = vmatpush1.msra.mxu0 0.0
        %1773 = vmatprep.subr.mxu0 0.0
        %1774 = vmatpush1.msra.mxu0 0.0
        %1775 = vmatprep.subr.mxu0 0.0
        %1776 = vmatpush1.msra.mxu0 0.0
        %1777 = vmatprep.subr.mxu0 0.0
        %1778 = vmatpush1.msra.mxu0 0.0
        %1779 = vmatprep.subr.mxu0 0.0
        %1780 = vmatpush1.msra.mxu0 0.0
        %1781 = vmatprep.subr.mxu0 0.0
        %1782 = vmatpush1.msra.mxu0 0.0
        %1783 = vmatprep.subr.mxu0 0.0
        %1784 = vmatpush1.msra.mxu0 0.0
        %1785 = vmatprep.subr.mxu0 0.0
        %1786 = vmatpush1.msra.mxu0 0.0
        %1787 = vmatprep.subr.mxu0 0.0
        %1788 = vmatpush1.msra.mxu0 0.0
        %1789 = vmatprep.subr.mxu0 0.0
        %1790 = vmatpush1.msra.mxu0 0.0
        %1791 = vmatprep.subr.mxu0 0.0
        %1792 = vmatpush1.msra.mxu0 0.0
        %1793 = vmatprep.subr.mxu0 0.0
        %1794 = vmatpush1.msra.mxu0 0.0
        %1795 = vmatprep.subr.mxu0 0.0
        %1796 = vmatpush1.msra.mxu0 0.0
        %1797 = vmatprep.subr.mxu0 0.0
        %1798 = vmatpush1.msra.mxu0 0.0
        %1799 = vmatprep.subr.mxu0 0.0
        %1800 = vmatpush1.msra.mxu0 0.0
        %1801 = vmatprep.subr.mxu0 0.0
        %1802 = vmatpush1.msra.mxu0 0.0
        %1803 = vmatprep.subr.mxu0 0.0
        %1804 = vmatpush1.msra.mxu0 0.0
        %1805 = vmatprep.subr.mxu0 0.0
        %1806 = vmatpush1.msra.mxu0 0.0
        %1807 = vmatprep.subr.mxu0 0.0
        %1808 = vmatpush1.msra.mxu0 0.0
        %1809 = vmatprep.subr.mxu0 0.0
        %1810 = vmatpush1.msra.mxu0 0.0
        %1811 = vmatprep.subr.mxu0 0.0
        %1812 = vmatpush1.msra.mxu0 0.0
        %1813 = vmatprep.subr.mxu0 0.0
        %1814 = vmatpush1.msra.mxu0 0.0
        %1815 = vmatprep.subr.mxu0 0.0
        %1816 = vmatpush1.msra.mxu0 0.0
        %1817 = vmatprep.subr.mxu0 0.0
        %1818 = vmatpush1.msra.mxu0 0.0
        %1819 = vmatprep.mubr.f32.mxu0 0.0
        %v1820 = vand.u32 %v1496, 4294901760
        %v1821 = vsub.f32 %v1496, %v1820
        %v1822 = vand.u32 %v1821, 4294901760
        %1823 = vmatmul.mubr.f32.gmra.mrb[0].mxu0 %v1822
        %v1824 = vpop.f32.mrb[0].mxu0
        %v1825 = vadd.f32 %v1747, %v1824
        %v1826 = vpop.f32.mrb[0].mxu0
        %v1827 = vadd.f32 %v1749, %v1826
        %1828 = vdwg.mxu0
        %v1829 = vand.u32 %v1487, 4294901760
        %v1830 = vsub.f32 %v1487, %v1829
        %v1831 = vand.u32 %v1830, 4294901760
        %1832 = vmatprep.subr.mxu0 %v1831
        %v1833 = vand.u32 %v1486, 4294901760
        %v1834 = vsub.f32 %v1486, %v1833
        %v1835 = vand.u32 %v1834, 4294901760
        %1836 = vmatpush1.msra.mxu0 %v1835
        %v1837 = vand.u32 %v1493, 4294901760
        %v1838 = vsub.f32 %v1493, %v1837
        %v1839 = vand.u32 %v1838, 4294901760
        %1840 = vmatprep.subr.mxu0 %v1839
        %v1841 = vand.u32 %v1492, 4294901760
        %v1842 = vsub.f32 %v1492, %v1841
        %v1843 = vand.u32 %v1842, 4294901760
        %1844 = vmatpush1.msra.mxu0 %v1843
        %1845 = vmatprep.subr.mxu0 0.0
        %1846 = vmatpush1.msra.mxu0 0.0
        %1847 = vmatprep.subr.mxu0 0.0
        %1848 = vmatpush1.msra.mxu0 0.0
        %1849 = vmatprep.subr.mxu0 0.0
        %1850 = vmatpush1.msra.mxu0 0.0
        %1851 = vmatprep.subr.mxu0 0.0
        %1852 = vmatpush1.msra.mxu0 0.0
        %1853 = vmatprep.subr.mxu0 0.0
        %1854 = vmatpush1.msra.mxu0 0.0
        %1855 = vmatprep.subr.mxu0 0.0
        %1856 = vmatpush1.msra.mxu0 0.0
        %1857 = vmatprep.subr.mxu0 0.0
        %1858 = vmatpush1.msra.mxu0 0.0
        %1859 = vmatprep.subr.mxu0 0.0
        %1860 = vmatpush1.msra.mxu0 0.0
        %1861 = vmatprep.subr.mxu0 0.0
        %1862 = vmatpush1.msra.mxu0 0.0
        %1863 = vmatprep.subr.mxu0 0.0
        %1864 = vmatpush1.msra.mxu0 0.0
        %1865 = vmatprep.subr.mxu0 0.0
        %1866 = vmatpush1.msra.mxu0 0.0
        %1867 = vmatprep.subr.mxu0 0.0
        %1868 = vmatpush1.msra.mxu0 0.0
        %1869 = vmatprep.subr.mxu0 0.0
        %1870 = vmatpush1.msra.mxu0 0.0
        %1871 = vmatprep.subr.mxu0 0.0
        %1872 = vmatpush1.msra.mxu0 0.0
        %1873 = vmatprep.subr.mxu0 0.0
        %1874 = vmatpush1.msra.mxu0 0.0
        %1875 = vmatprep.subr.mxu0 0.0
        %1876 = vmatpush1.msra.mxu0 0.0
        %1877 = vmatprep.subr.mxu0 0.0
        %1878 = vmatpush1.msra.mxu0 0.0
        %1879 = vmatprep.subr.mxu0 0.0
        %1880 = vmatpush1.msra.mxu0 0.0
        %1881 = vmatprep.subr.mxu0 0.0
        %1882 = vmatpush1.msra.mxu0 0.0
        %1883 = vmatprep.subr.mxu0 0.0
        %1884 = vmatpush1.msra.mxu0 0.0
        %1885 = vmatprep.subr.mxu0 0.0
        %1886 = vmatpush1.msra.mxu0 0.0
        %1887 = vmatprep.subr.mxu0 0.0
        %1888 = vmatpush1.msra.mxu0 0.0
        %1889 = vmatprep.subr.mxu0 0.0
        %1890 = vmatpush1.msra.mxu0 0.0
        %1891 = vmatprep.subr.mxu0 0.0
        %1892 = vmatpush1.msra.mxu0 0.0
        %1893 = vmatprep.subr.mxu0 0.0
        %1894 = vmatpush1.msra.mxu0 0.0
        %1895 = vmatprep.subr.mxu0 0.0
        %1896 = vmatpush1.msra.mxu0 0.0
        %1897 = vmatprep.subr.mxu0 0.0
        %1898 = vmatpush1.msra.mxu0 0.0
        %1899 = vmatprep.subr.mxu0 0.0
        %1900 = vmatpush1.msra.mxu0 0.0
        %1901 = vmatprep.subr.mxu0 0.0
        %1902 = vmatpush1.msra.mxu0 0.0
        %1903 = vmatprep.subr.mxu0 0.0
        %1904 = vmatpush1.msra.mxu0 0.0
        %1905 = vmatprep.mubr.f32.mxu0 0.0
        %v1906 = vand.u32 %v1496, 4294901760
        %1907 = vmatmul.mubr.f32.gmra.mrb[0].mxu0 %v1906
        %v1908 = vpop.f32.mrb[0].mxu0
        %v1909 = vadd.f32 %v1825, %v1908
        %v1910 = vpop.f32.mrb[0].mxu0
        %v1911 = vadd.f32 %v1827, %v1910
        %1912 = vdwg.mxu0
        %v1913 = vand.u32 %v1487, 4294901760
        %1914 = vmatprep.subr.mxu0 %v1913
        %v1915 = vand.u32 %v1486, 4294901760
        %1916 = vmatpush1.msra.mxu0 %v1915
        %v1917 = vand.u32 %v1493, 4294901760
        %1918 = vmatprep.subr.mxu0 %v1917
        %v1919 = vand.u32 %v1492, 4294901760
        %1920 = vmatpush1.msra.mxu0 %v1919
        %1921 = vmatprep.subr.mxu0 0.0
        %1922 = vmatpush1.msra.mxu0 0.0
        %1923 = vmatprep.subr.mxu0 0.0
        %1924 = vmatpush1.msra.mxu0 0.0
        %1925 = vmatprep.subr.mxu0 0.0
        %1926 = vmatpush1.msra.mxu0 0.0
        %1927 = vmatprep.subr.mxu0 0.0
        %1928 = vmatpush1.msra.mxu0 0.0
        %1929 = vmatprep.subr.mxu0 0.0
        %1930 = vmatpush1.msra.mxu0 0.0
        %1931 = vmatprep.subr.mxu0 0.0
        %1932 = vmatpush1.msra.mxu0 0.0
        %1933 = vmatprep.subr.mxu0 0.0
        %1934 = vmatpush1.msra.mxu0 0.0
        %1935 = vmatprep.subr.mxu0 0.0
        %1936 = vmatpush1.msra.mxu0 0.0
        %1937 = vmatprep.subr.mxu0 0.0
        %1938 = vmatpush1.msra.mxu0 0.0
        %1939 = vmatprep.subr.mxu0 0.0
        %1940 = vmatpush1.msra.mxu0 0.0
        %1941 = vmatprep.subr.mxu0 0.0
        %1942 = vmatpush1.msra.mxu0 0.0
        %1943 = vmatprep.subr.mxu0 0.0
        %1944 = vmatpush1.msra.mxu0 0.0
        %1945 = vmatprep.subr.mxu0 0.0
        %1946 = vmatpush1.msra.mxu0 0.0
        %1947 = vmatprep.subr.mxu0 0.0
        %1948 = vmatpush1.msra.mxu0 0.0
        %1949 = vmatprep.subr.mxu0 0.0
        %1950 = vmatpush1.msra.mxu0 0.0
        %1951 = vmatprep.subr.mxu0 0.0
        %1952 = vmatpush1.msra.mxu0 0.0
        %1953 = vmatprep.subr.mxu0 0.0
        %1954 = vmatpush1.msra.mxu0 0.0
        %1955 = vmatprep.subr.mxu0 0.0
        %1956 = vmatpush1.msra.mxu0 0.0
        %1957 = vmatprep.subr.mxu0 0.0
        %1958 = vmatpush1.msra.mxu0 0.0
        %1959 = vmatprep.subr.mxu0 0.0
        %1960 = vmatpush1.msra.mxu0 0.0
        %1961 = vmatprep.subr.mxu0 0.0
        %1962 = vmatpush1.msra.mxu0 0.0
        %1963 = vmatprep.subr.mxu0 0.0
        %1964 = vmatpush1.msra.mxu0 0.0
        %1965 = vmatprep.subr.mxu0 0.0
        %1966 = vmatpush1.msra.mxu0 0.0
        %1967 = vmatprep.subr.mxu0 0.0
        %1968 = vmatpush1.msra.mxu0 0.0
        %1969 = vmatprep.subr.mxu0 0.0
        %1970 = vmatpush1.msra.mxu0 0.0
        %1971 = vmatprep.subr.mxu0 0.0
        %1972 = vmatpush1.msra.mxu0 0.0
        %1973 = vmatprep.subr.mxu0 0.0
        %1974 = vmatpush1.msra.mxu0 0.0
        %1975 = vmatprep.subr.mxu0 0.0
        %1976 = vmatpush1.msra.mxu0 0.0
        %1977 = vmatprep.subr.mxu0 0.0
        %1978 = vmatpush1.msra.mxu0 0.0
        %1979 = vmatprep.subr.mxu0 0.0
        %1980 = vmatpush1.msra.mxu0 0.0
        %1981 = vmatprep.mubr.f32.mxu0 0.0
        %v1982 = vand.u32 %v1496, 4294901760
        %1983 = vmatmul.mubr.f32.gmra.mrb[0].mxu0 %v1982
        %v1984 = vpop.f32.mrb[0].mxu0
        %v1985 = vadd.f32 %v1909, %v1984
        %v1986 = vpop.f32.mrb[0].mxu0
        %v1987 = vadd.f32 %v1911, %v1986
        %1988 = vdwg.mxu0
        %1989 = vrot.lane.b32.xlu0 %v1985, 3
        %v1990 = vpop.permute.xlu0 %1989
        %1991 = vrot.lane.b32.xlu0 %v1987, 3
        %v1992 = vpop.permute.xlu0 %1991
        %vm1993 = vcmp.lt.s32.totalorder %v1351, 3
        %v1994 = vsel %vm1993, %v1990, %v1992
        %v1995 = vsel %vm1993, %v1992, %v1990
        %v1996 = vmul.f32 %v1995, %v1307
        %v1997 = vmul.f32 %v1994, %v1308
        %v2000 = vrot.slane %v1996, 5
        %v2001 = vrot.slane %v1997, 5
        %v2004 = vadd.f32 %v1985, %v2000
        %v2005 = vadd.f32 %v1987, %v2001
        %v2008 = vrot.slane %v1985, 1
        %v2009 = vrot.slane %v1987, 1
        %2012 = vrot.lane.b32.xlu0 %v2008, 2
        %v2013 = vpop.permute.xlu0 %2012
        %2014 = vrot.lane.b32.xlu0 %v2009, 2
        %v2015 = vpop.permute.xlu0 %2014
        %vm2016 = vcmp.lt.s32.totalorder %v1351, 2
        %v2017 = vsel %vm2016, %v2013, %v2015
        %v2018 = vsel %vm2016, %v2015, %v2013
        %v2021 = vrot.slane %v1307, 1
        %v2022 = vrot.slane %v1308, 1
        %v2025 = vmul.f32 %v2018, %v2021
        %v2026 = vmul.f32 %v2017, %v2022
        %v2029 = vrot.slane %v2025, 5
        %v2030 = vrot.slane %v2026, 5
        %v2033 = vadd.f32 %v2004, %v2029
        %v2034 = vadd.f32 %v2005, %v2030
        %v2035 = vrot.slane %v1985, 2
        %v2036 = vrot.slane %v1987, 2
        %2039 = vrot.lane.b32.xlu0 %v2035, 1
        %v2040 = vpop.permute.xlu0 %2039
        %2041 = vrot.lane.b32.xlu0 %v2036, 1
        %v2042 = vpop.permute.xlu0 %2041
        %vm2043 = vcmp.lt.s32.totalorder %v1351, 1
        %v2044 = vsel %vm2043, %v2040, %v2042
        %v2045 = vsel %vm2043, %v2042, %v2040
        %v2046 = vrot.slane %v1307, 2
        %v2047 = vrot.slane %v1308, 2
        %v2050 = vmul.f32 %v2045, %v2046
        %v2051 = vmul.f32 %v2044, %v2047
        %v2054 = vrot.slane %v2050, 5
        %v2055 = vrot.slane %v2051, 5
        %v2058 = vadd.f32 %v2033, %v2054
        %v2059 = vadd.f32 %v2034, %v2055
        %v2060 = vrot.slane %v1985, 4
        %v2061 = vrot.slane %v1987, 4
        %2064 = vrot.lane.b32.xlu0 %v2060, 127
        %v2065 = vpop.permute.xlu0 %2064
        %2066 = vrot.lane.b32.xlu0 %v2061, 127
        %v2067 = vpop.permute.xlu0 %2066
        %vm2068 = vcmp.lt.s32.totalorder %v1351, 127
        %v2069 = vsel %vm2068, %v2065, %v2067
        %v2070 = vsel %vm2068, %v2067, %v2065
        %v2071 = vrot.slane %v1307, 4
        %v2072 = vrot.slane %v1308, 4
        %v2075 = vmul.f32 %v2069, %v2071
        %v2076 = vmul.f32 %v2070, %v2072
        %v2079 = vrot.slane %v2075, 5
        %v2080 = vrot.slane %v2076, 5
        %v2083 = vadd.f32 %v2058, %v2079
        %v2084 = vadd.f32 %v2059, %v2080
        %v2085 = vrot.slane %v1985, 5
        %v2086 = vrot.slane %v1987, 5
        %2089 = vrot.lane.b32.xlu0 %v2085, 126
        %v2090 = vpop.permute.xlu0 %2089
        %2091 = vrot.lane.b32.xlu0 %v2086, 126
        %v2092 = vpop.permute.xlu0 %2091
        %vm2093 = vcmp.lt.s32.totalorder %v1351, 126
        %v2094 = vsel %vm2093, %v2090, %v2092
        %v2095 = vsel %vm2093, %v2092, %v2090
        %v2096 = vrot.slane %v1307, 5
        %v2097 = vrot.slane %v1308, 5
        %v2100 = vmul.f32 %v2094, %v2096
        %v2101 = vmul.f32 %v2095, %v2097
        %v2104 = vrot.slane %v2100, 5
        %v2105 = vrot.slane %v2101, 5
        %v2108 = vadd.f32 %v2083, %v2104
        %v2109 = vadd.f32 %v2084, %v2105
        %v2110 = vrot.slane %v1985, 6
        %v2111 = vrot.slane %v1987, 6
        %2114 = vrot.lane.b32.xlu0 %v2110, 125
        %v2115 = vpop.permute.xlu0 %2114
        %2116 = vrot.lane.b32.xlu0 %v2111, 125
        %v2117 = vpop.permute.xlu0 %2116
        %vm2118 = vcmp.lt.s32.totalorder %v1351, 125
        %v2119 = vsel %vm2118, %v2115, %v2117
        %v2120 = vsel %vm2118, %v2117, %v2115
        %v2121 = vrot.slane %v1307, 6
        %v2122 = vrot.slane %v1308, 6
        %v2125 = vmul.f32 %v2119, %v2121
        %v2126 = vmul.f32 %v2120, %v2122
        %v2129 = vrot.slane %v2125, 5
        %v2130 = vrot.slane %v2126, 5
        %v2133 = vadd.f32 %v2108, %v2129
        %v2134 = vadd.f32 %v2109, %v2130
        %v2135 = vstv %s1309
        %v2136 = vadd.f32 %v2133, %v2135
        %v2137 = vadd.f32 %v2134, %v2135
        %v2138 = vxor.u32 %v2136, 2147483648
        %v2139 = vxor.u32 %v2137, 2147483648
        %v2140 = vmul.f32 %v2138, 1.442695
        %v2141 = vpow.pop %v2140
        %v2142 = vmul.f32 %v2139, 1.442695
        %v2143 = vpow.pop %v2142
        %v2144 = vadd.f32 %v2141, 1.0
        %v2145 = vadd.f32 %v2143, 1.0
        %v2146 = vrcp.pop %v2144
        %v2147 = vmul.f32 1.0, %v2146
        %v2148 = vrcp.pop %v2145
        %v2149 = vmul.f32 1.0, %v2148
        %v2150 = vlaneseq
        %v2151 = vshrl.u32 %v2150, 7
        %v2152 = vsub.s32 3, %v2151
        %v2153 = vrot.slane %v2147, %v2152
        %v2154 = vlaneseq
        %v2155 = vshrl.u32 %v2154, 7
        %v2156 = vsub.s32 3, %v2155
        %v2157 = vrot.slane %v2149, %v2156
        %v2158 = vmul.f32 %v1315, %v2153
        %v2159 = vmul.f32 %v1316, %v2157
        %2160 = vst [vmem:[%s362] sm:$0xff] %v2158
        %2161 = vst [vmem:[%s362 + $0x8] sm:$0xff] %v2159
        %s2162 = sand.u32 %s230, 1
        %s2163 = scalar_lea.sflag [#allocation5], %s2162
        %s2164 = sand.u32 %s230, 1
        %s2165 = smul.addr %s2164, 16
        %s2166 = scalar_lea.vmem [#allocation8], %s2165
        // Predicated region
        $region65: #{tpu_custom_call.1} parent=55 // pred_check
          %p2167 = pneg %p240
        $region66: #{tpu_custom_call.1} parent=55 // pred_check_branch
          %2169 = sbr.rel (%p2167) target = $region68
        $region67: #{tpu_custom_call.1} parent=55 // pred_region
          %s2171 = ssub.s32 256, 256
          %2172 = vsyncadd %s2163, %s2171
          %s2173 = smul.addr %s28, 2
          %s2174 = smul.addr %s2173, 128
          %s2175 = scalar_lea.hbm %s9, %s2174
          %s2177 = sshll.u32 %s2166, 4
          %s2178 = int_to_ptr.vmem [resolvable:$true] %s2177
          %2180 = dma.vmem_to_hbm [thread:$0]  %s2178, 256, %s2175, %s2163
        $region68: #{tpu_custom_call.1} parent=55 // pred_fallthru
          _
      $region56: #{tpu_custom_call.1} parent=5 // pred_fallthru
        _
      %p2181 = scmp.le.s32.totalorder 2, %s23
      // Predicated region
      $region69: #{tpu_custom_call.1} parent=5 // pred_check
        %p2182 = pneg %p2181
      $region70: #{tpu_custom_call.1} parent=5 // pred_check_branch
        %2184 = sbr.rel (%p2182) target = $region72
      $region71: #{tpu_custom_call.1} parent=5 // pred_region
        %s2185 = ssub.s32 %s23, 2
        // Predicated region
        $region73: #{tpu_custom_call.1} parent=71 // pred_check
          %p2186 = pneg %p246
        $region74: #{tpu_custom_call.1} parent=71 // pred_check_branch
          %2188 = sbr.rel (%p2186) target = $region76
        $region75: #{tpu_custom_call.1} parent=71 // pred_region
          %s2189 = sand.u32 %s231, 1
          %s2190 = scalar_lea.sflag [#allocation5], %s2189
          %s2191 = sand.u32 %s231, 1
          %s2192 = smul.addr %s2191, 16
          %s2193 = scalar_lea.vmem [#allocation8], %s2192
          %2194 = dma.done %s2190, 256
        $region76: #{tpu_custom_call.1} parent=71 // pred_fallthru
          _
      $region72: #{tpu_custom_call.1} parent=5 // pred_fallthru
        _
    $region6: #{tpu_custom_call.1} parent=1 // loop_footer
      %s27 = sadd.s32 1, %s23
    $region7: #{tpu_custom_call.1} parent=1 // loop_footer_branch
      %22 = sbr.rel target = $region3
    $region8: #{tpu_custom_call.1} parent=1 // loop_exit
      _
    %2195 = vsyncpa [#allocation4], 1
    %s2196 = scalar_lea.sflag [#allocation4], 1
    %2197 = vsyncpa %s2196, 1
    %2198 = vsyncpa [#allocation7], 1
    %2199 = vsyncpa [#allocation5], 1
    %s2200 = scalar_lea.sflag [#allocation5], 1
    %2201 = vsyncpa %s2200, 1

</llo_original>
